<compile_context>
chip_gen: v7x
topology: tpu7x:2x2x1
jax: 0.10.0
libtpu: 0.0.40
codegen_flags: <defaults>
</compile_context>

<pallas_src>
import functools

import jax
import jax.numpy as jnp
import numpy as np
from jax.experimental import pallas as pl
from jax.experimental.pallas import tpu as pltpu


KERNEL_SIZE = 11
SIGMA = 1.5
_C1 = 0.01 ** 2
_C2 = 0.03 ** 2
_EPS = 1e-12


# ----------------------------- host-side helpers -----------------------------
def _gaussian_1d(kernel_size: int, sigma: float) -> np.ndarray:
    # Same construction as SSIMLoss._create_gaussian_kernel (kernel_2d is the
    # outer product k1d^T @ k1d, so a separable blur is exactly equivalent).
    start = (1 - kernel_size) / 2
    end = (1 + kernel_size) / 2
    k = np.arange(start, end, 1.0, dtype=np.float32)
    k = np.exp(-((k / sigma) ** 2) / 2.0)
    return (k / k.sum()).astype(np.float32)


def _band_matrix(n: int, k1d: np.ndarray, pad: int) -> np.ndarray:
    """(n, n) band matrix M with (M @ v)[o] = sum_t k1d[t] * v[o + t - pad];
    out-of-range taps dropped == F.conv2d zero padding."""
    m = np.zeros((n, n), dtype=np.float32)
    rows = np.arange(n)
    for t, w in enumerate(k1d):
        cols = rows + t - pad
        ok = (cols >= 0) & (cols < n)
        m[rows[ok], cols[ok]] += np.float32(w)
    return m


def _choose_row_tile(h: int, cap: int) -> int:
    if h <= cap:
        return h
    for t in (512, 256, 128, 64, 32):
        if t <= cap and h % t == 0:
            return t
    return h  # awkward H: fall back to a single full-height tile


def _split_hi_lo(a: jnp.ndarray) -> jnp.ndarray:
    """Stack bf16 (hi, lo) parts of an f32 array along a new leading axis."""
    hi = a.astype(jnp.bfloat16)
    lo = (a - hi.astype(jnp.float32)).astype(jnp.bfloat16)
    return jnp.stack([hi, lo])


def _vmem_limit_bytes() -> int:
    # Generation-aware VMEM budget (~85% of physical: ~54 MiB on v7x,
    # ~109 MiB on v5e/v6e); conservative 48 MiB fallback.
    try:
        cap = getattr(pltpu.get_tpu_info(), "vmem_capacity_bytes", None)
        if cap:
            return min(int(cap * 0.85), 112 * 1024 * 1024)
    except Exception:
        pass
    return 48 * 1024 * 1024


# ------------------------------ kernel helpers -------------------------------
def _split3(a):
    """bf16 hi/lo split of an f32 array (in-kernel)."""
    hi = a.astype(jnp.bfloat16)
    lo = (a - hi.astype(jnp.float32)).astype(jnp.bfloat16)
    return hi, lo


def _dot3(a_hi, a_lo, b_hi, b_lo):
    """~f32-accurate matmul from three native bf16 MXU passes (a_lo*b_lo dropped)."""
    acc = jnp.dot(a_hi, b_hi, preferred_element_type=jnp.float32)
    acc += jnp.dot(a_hi, b_lo, preferred_element_type=jnp.float32)
    acc += jnp.dot(a_lo, b_hi, preferred_element_type=jnp.float32)
    return acc


def _ssim_tile(x_ref, y_ref, kv_ref, kh_ref, *, th, khalo, h, w, padr):
    """SSIM map for one (th, w) row tile of one image plane."""
    r = pl.program_id(1)

    if khalo == h:                      # single row tile: whole plane
        xs = x_ref[0]
        ys = y_ref[0]
    else:                               # haloed row window for this tile
        start = jnp.clip(r * th - padr, 0, h - khalo)
        start = pl.multiple_of(start, 8)     # th, padr, h-khalo are multiples of 8
        xs = x_ref[0, pl.ds(start, khalo), :]
        ys = y_ref[0, pl.ds(start, khalo), :]

    x32 = xs.astype(jnp.float32)
    y32 = ys.astype(jnp.float32)

    kv_hi = kv_ref[0, r]                # (th, khalo) bf16 banded slab (hi part)
    kv_lo = kv_ref[1, r]
    kh_hi = kh_ref[0]                   # (w, w) bf16 band matrix (hi part)
    kh_lo = kh_ref[1]

    def vblur(p):
        p_hi, p_lo = _split3(p)
        return _dot3(kv_hi, kv_lo, p_hi, p_lo)               # (th, w or 5w)

    # ---- vertical pass: one stacked banded matmul when the lane slabs are
    # 128-aligned (MXU lane dim = 5*w, one Kv push); else 5 separate matmuls.
    if w % 128 == 0:
        stacked = jnp.concatenate(
            [x32, y32, x32 * x32, y32 * y32, x32 * y32], axis=1)   # (khalo, 5w)
        t = vblur(stacked)                                          # (th, 5w)
        slabs = [t[:, k * w:(k + 1) * w] for k in range(5)]
    else:
        slabs = [vblur(x32), vblur(y32), vblur(x32 * x32),
                 vblur(y32 * y32), vblur(x32 * y32)]

    # ---- horizontal pass per moment slab ------------------------------------
    def hblur(s):
        s_hi, s_lo = _split3(s)
        return _dot3(s_hi, s_lo, kh_hi, kh_lo)               # (th, w)

    ux = hblur(slabs[0])
    uy = hblur(slabs[1])
    uxux = ux * ux
    uyuy = uy * uy
    uxuy = ux * uy
    vx = hblur(slabs[2]) - uxux
    vy = hblur(slabs[3]) - uyuy
    vxy = hblur(slabs[4]) - uxuy

    num = (2.0 * uxuy + _C1) * (2.0 * vxy + _C2)
    den = (uxux + uyuy + _C1) * (vx + vy + _C2) + _EPS
    inv = pl.reciprocal(den, approx=True)                    # EUP slot
    inv = inv * (2.0 - den * inv)                            # one Newton step
    return num * inv


def _ssim_sum_kernel(x_ref, y_ref, kv_ref, kh_ref, out_ref, **cfg):
    # Loss path: only lane-dense per-tile column sums leave the kernel.
    ssim = _ssim_tile(x_ref, y_ref, kv_ref, kh_ref, **cfg)
    out_ref[0, 0] = jnp.sum(ssim, axis=0, keepdims=True)     # (1, W)


def _ssim_map_kernel(x_ref, y_ref, kv_ref, kh_ref, out_ref, **cfg):
    ssim = _ssim_tile(x_ref, y_ref, kv_ref, kh_ref, **cfg)
    out_ref[0] = ssim.astype(out_ref.dtype)                  # (TH, W)


# --------------------------------- wrapper ------------------------------------
def ssim_loss(x, y, kernel_size: int = KERNEL_SIZE, sigma: float = SIGMA,
              as_loss: bool = True, max_rows_per_tile: int = 512):
    """Pallas TPU implementation of SSIMLoss.forward (NCHW inputs, C == 3)."""
    B, C, H, W = x.shape
    assert C == 3, "SSIMLoss uses a depthwise (groups=3) Gaussian kernel"
    assert y.shape == x.shape
    N = B * C
    pad = kernel_size // 2
    padr = -(-pad // 8) * 8                         # halo rounded to a sublane multiple

    TH = _choose_row_tile(H, max_rows_per_tile)
    R = H // TH
    KH = H if R == 1 else TH + 2 * padr             # contraction window per row tile

    # No wrapper-side pad / dtype cast: the conv zero padding is baked into the
    # band matrices and the f32 cast happens on the VMEM tile inside the kernel.
    xf = x.reshape(N, H, W)
    yf = y.reshape(N, H, W)

    k1d = _gaussian_1d(kernel_size, sigma)
    kv_full = _band_matrix(H, k1d, pad)                                # (H, H)
    starts = np.clip(np.arange(R) * TH - padr, 0, H - KH)
    kv_slabs = np.stack([kv_full[r * TH:(r + 1) * TH, starts[r]:starts[r] + KH]
                         for r in range(R)])                           # (R, TH, KH)
    kh_band = _band_matrix(W, k1d, pad).T                              # (W, W)

    kv_split = _split_hi_lo(jnp.asarray(kv_slabs))                     # (2, R, TH, KH) bf16
    kh_split = _split_hi_lo(jnp.asarray(kh_band))                      # (2, W, W) bf16

    cfg = dict(th=TH, khalo=KH, h=H, w=W, padr=padr)
    in_specs = [
        pl.BlockSpec((1, H, W), lambda n, r: (n, 0, 0)),     # x plane, reused across r
        pl.BlockSpec((1, H, W), lambda n, r: (n, 0, 0)),     # y plane, reused across r
        pl.BlockSpec(memory_space=pltpu.MemorySpace.VMEM),   # Kv slabs: whole, 1 buffer
        pl.BlockSpec(memory_space=pltpu.MemorySpace.VMEM),   # Kh band : whole, 1 buffer
    ]
    compiler_params = pltpu.CompilerParams(
        dimension_semantics=("parallel", "parallel"),
        vmem_limit_bytes=_vmem_limit_bytes(),
    )

    if as_loss:
        col_sums = pl.pallas_call(
            functools.partial(_ssim_sum_kernel, **cfg),
            grid=(N, R),
            out_shape=jax.ShapeDtypeStruct((N, R, 1, W), jnp.float32),
            in_specs=in_specs,
            out_specs=pl.BlockSpec((1, 1, 1, W), lambda n, r: (n, r, 0, 0)),
            compiler_params=compiler_params,
        )(xf, yf, kv_split, kh_split)
        return 1.0 - jnp.sum(col_sums) / float(N * H * W)

    ssim_map = pl.pallas_call(
        functools.partial(_ssim_map_kernel, **cfg),
        grid=(N, R),
        out_shape=jax.ShapeDtypeStruct((N, H, W), x.dtype),
        in_specs=in_specs,
        out_specs=pl.BlockSpec((1, TH, W), lambda n, r: (n, r, 0)),
        compiler_params=compiler_params,
    )(xf, yf, kv_split, kh_split)
    return ssim_map.reshape(B, C, H, W)


# ---- independent float64 numpy reference (correctness check only) -----------
def _ref_ssim_np(x, y, kernel_size=KERNEL_SIZE, sigma=SIGMA):
    x = np.asarray(x, dtype=np.float64)
    y = np.asarray(y, dtype=np.float64)
    B, C, H, W = x.shape
    k1 = _gaussian_1d(kernel_size, sigma).astype(np.float64)
    k2 = np.outer(k1, k1)
    pad = kernel_size // 2

    def conv(z):
        zp = np.pad(z, ((0, 0), (0, 0), (pad, pad), (pad, pad)))
        out = np.zeros_like(z)
        for i in range(kernel_size):
            for j in range(kernel_size):
                out += k2[i, j] * zp[:, :, i:i + H, j:j + W]
        return out

    ux, uy = conv(x), conv(y)
    uxx, uyy, uxy = conv(x * x), conv(y * y), conv(x * y)
    vx, vy, vxy = uxx - ux * ux, uyy - uy * uy, uxy - ux * uy
    num = (2 * ux * uy + _C1) * (2 * vxy + _C2)
    den = (ux ** 2 + uy ** 2 + _C1) * (vx + vy + _C2)
    ssim = num / (den + _EPS)
    return 1.0 - ssim.mean(), ssim


if __name__ == "__main__":
    key = jax.random.PRNGKey(0)

    def _check(shape, max_rows):
        kx, ky = jax.random.split(jax.random.fold_in(key, shape[2]))
        x = jax.random.uniform(kx, shape, dtype=jnp.float32)
        y = jax.random.uniform(ky, shape, dtype=jnp.float32)

        loss = jax.block_until_ready(
            ssim_loss(x, y, as_loss=True, max_rows_per_tile=max_rows))
        smap = jax.block_until_ready(
            ssim_loss(x, y, as_loss=False, max_rows_per_tile=max_rows))

        ref_loss, ref_map = _ref_ssim_np(x, y)
        # The 3-pass bf16 blur leaves ~1e-5 relative error on the Gaussian
        # moments; after the uxx - ux*ux cancellation this can reach ~1e-4
        # absolute on near-zero SSIM map values, while the mean (loss)
        # averages it back out — tolerances are set accordingly.
        np.testing.assert_allclose(np.asarray(loss), ref_loss,
                                   rtol=1e-4, atol=5e-5)
        np.testing.assert_allclose(np.asarray(smap), ref_map,
                                   rtol=1e-3, atol=5e-4)

    _check((2, 3, 16, 16), max_rows=512)     # single-tile path (R=1)
    _check((1, 3, 128, 128), max_rows=64)    # row-tiled, banded-halo path (R=2)
    print("KERNEL_OK")
</pallas_src>

<mosaic_0001>
module attributes {stable_mosaic.version = 11 : i64} {
  func.func @_ssim_sum_kernel(%arg0: i32, %arg1: i32, %arg2: memref<1x16x16xf32, #tpu.memory_space<vmem>>, %arg3: memref<1x16x16xf32, #tpu.memory_space<vmem>>, %arg4: memref<2x1x16x16xbf16, #tpu.memory_space<vmem>>, %arg5: memref<2x16x16xbf16, #tpu.memory_space<vmem>>, %arg6: memref<1x1x1x16xf32, #tpu.memory_space<vmem>>) attributes {dimension_semantics = [#tpu.dimension_semantics<parallel>, #tpu.dimension_semantics<parallel>], iteration_bounds = array<i64: 6, 1>, scalar_prefetch = 0 : i64, scratch_operands = 0 : i64, tpu.core_type = #tpu.core_type<tc>, window_params = [{transform_indices = @transform_0, window_bounds = array<i64: 1, 16, 16>}, {transform_indices = @transform_1, window_bounds = array<i64: 1, 16, 16>}, {pipeline_mode = #tpu.pipeline_mode<synchronous>, transform_indices = @transform_2, window_bounds = array<i64: 2, 1, 16, 16>}, {pipeline_mode = #tpu.pipeline_mode<synchronous>, transform_indices = @transform_3, window_bounds = array<i64: 2, 16, 16>}, {transform_indices = @transform_4, window_bounds = array<i64: 1, 1, 1, 16>}]} {
    %c0 = arith.constant 0 : index
    %c0_0 = arith.constant 0 : index
    %c0_1 = arith.constant 0 : index
    %0 = vector.load %arg2[%c0, %c0_0, %c0_1] : memref<1x16x16xf32, #tpu.memory_space<vmem>>, vector<1x16x16xf32>
    %1 = vector.shape_cast %0 : vector<1x16x16xf32> to vector<16x16xf32>
    %c0_2 = arith.constant 0 : index
    %c0_3 = arith.constant 0 : index
    %c0_4 = arith.constant 0 : index
    %2 = vector.load %arg3[%c0_2, %c0_3, %c0_4] : memref<1x16x16xf32, #tpu.memory_space<vmem>>, vector<1x16x16xf32>
    %3 = vector.shape_cast %2 : vector<1x16x16xf32> to vector<16x16xf32>
    %c0_5 = arith.constant 0 : index
    %4 = arith.index_cast %arg1 : i32 to index
    %c0_6 = arith.constant 0 : index
    %c0_7 = arith.constant 0 : index
    %5 = vector.load %arg4[%c0_5, %4, %c0_6, %c0_7] : memref<2x1x16x16xbf16, #tpu.memory_space<vmem>>, vector<1x1x16x16xbf16>
    %6 = vector.shape_cast %5 : vector<1x1x16x16xbf16> to vector<16x16xbf16>
    %c1 = arith.constant 1 : index
    %7 = arith.index_cast %arg1 : i32 to index
    %c0_8 = arith.constant 0 : index
    %c0_9 = arith.constant 0 : index
    %8 = vector.load %arg4[%c1, %7, %c0_8, %c0_9] : memref<2x1x16x16xbf16, #tpu.memory_space<vmem>>, vector<1x1x16x16xbf16>
    %9 = vector.shape_cast %8 : vector<1x1x16x16xbf16> to vector<16x16xbf16>
    %c0_10 = arith.constant 0 : index
    %c0_11 = arith.constant 0 : index
    %c0_12 = arith.constant 0 : index
    %10 = vector.load %arg5[%c0_10, %c0_11, %c0_12] : memref<2x16x16xbf16, #tpu.memory_space<vmem>>, vector<1x16x16xbf16>
    %11 = vector.shape_cast %10 : vector<1x16x16xbf16> to vector<16x16xbf16>
    %c1_13 = arith.constant 1 : index
    %c0_14 = arith.constant 0 : index
    %c0_15 = arith.constant 0 : index
    %12 = vector.load %arg5[%c1_13, %c0_14, %c0_15] : memref<2x16x16xbf16, #tpu.memory_space<vmem>>, vector<1x16x16xbf16>
    %13 = vector.shape_cast %12 : vector<1x16x16xbf16> to vector<16x16xbf16>
    %14 = arith.truncf %1 : vector<16x16xf32> to vector<16x16xbf16>
    %15 = arith.extf %14 : vector<16x16xbf16> to vector<16x16xf32>
    %16 = arith.subf %1, %15 : vector<16x16xf32>
    %17 = arith.truncf %16 : vector<16x16xf32> to vector<16x16xbf16>
    %cst = arith.constant dense<0.000000e+00> : vector<16x16xf32>
    %18 = tpu.matmul %6, %14, %cst {dimension_numbers = #tpu.dot_dimension_numbers<[1], [0], [0], [1], [0, 0, 1, 1], [], []>} : vector<16x16xbf16>, vector<16x16xbf16>, vector<16x16xf32> -> vector<16x16xf32>
    %cst_16 = arith.constant dense<0.000000e+00> : vector<16x16xf32>
    %19 = tpu.matmul %6, %17, %cst_16 {dimension_numbers = #tpu.dot_dimension_numbers<[1], [0], [0], [1], [0, 0, 1, 1], [], []>} : vector<16x16xbf16>, vector<16x16xbf16>, vector<16x16xf32> -> vector<16x16xf32>
    %20 = arith.addf %18, %19 : vector<16x16xf32>
    %cst_17 = arith.constant dense<0.000000e+00> : vector<16x16xf32>
    %21 = tpu.matmul %9, %14, %cst_17 {dimension_numbers = #tpu.dot_dimension_numbers<[1], [0], [0], [1], [0, 0, 1, 1], [], []>} : vector<16x16xbf16>, vector<16x16xbf16>, vector<16x16xf32> -> vector<16x16xf32>
    %22 = arith.addf %20, %21 : vector<16x16xf32>
    %23 = arith.truncf %3 : vector<16x16xf32> to vector<16x16xbf16>
    %24 = arith.extf %23 : vector<16x16xbf16> to vector<16x16xf32>
    %25 = arith.subf %3, %24 : vector<16x16xf32>
    %26 = arith.truncf %25 : vector<16x16xf32> to vector<16x16xbf16>
    %cst_18 = arith.constant dense<0.000000e+00> : vector<16x16xf32>
    %27 = tpu.matmul %6, %23, %cst_18 {dimension_numbers = #tpu.dot_dimension_numbers<[1], [0], [0], [1], [0, 0, 1, 1], [], []>} : vector<16x16xbf16>, vector<16x16xbf16>, vector<16x16xf32> -> vector<16x16xf32>
    %cst_19 = arith.constant dense<0.000000e+00> : vector<16x16xf32>
    %28 = tpu.matmul %6, %26, %cst_19 {dimension_numbers = #tpu.dot_dimension_numbers<[1], [0], [0], [1], [0, 0, 1, 1], [], []>} : vector<16x16xbf16>, vector<16x16xbf16>, vector<16x16xf32> -> vector<16x16xf32>
    %29 = arith.addf %27, %28 : vector<16x16xf32>
    %cst_20 = arith.constant dense<0.000000e+00> : vector<16x16xf32>
    %30 = tpu.matmul %9, %23, %cst_20 {dimension_numbers = #tpu.dot_dimension_numbers<[1], [0], [0], [1], [0, 0, 1, 1], [], []>} : vector<16x16xbf16>, vector<16x16xbf16>, vector<16x16xf32> -> vector<16x16xf32>
    %31 = arith.addf %29, %30 : vector<16x16xf32>
    %32 = arith.mulf %1, %1 : vector<16x16xf32>
    %33 = arith.truncf %32 : vector<16x16xf32> to vector<16x16xbf16>
    %34 = arith.extf %33 : vector<16x16xbf16> to vector<16x16xf32>
    %35 = arith.subf %32, %34 : vector<16x16xf32>
    %36 = arith.truncf %35 : vector<16x16xf32> to vector<16x16xbf16>
    %cst_21 = arith.constant dense<0.000000e+00> : vector<16x16xf32>
    %37 = tpu.matmul %6, %33, %cst_21 {dimension_numbers = #tpu.dot_dimension_numbers<[1], [0], [0], [1], [0, 0, 1, 1], [], []>} : vector<16x16xbf16>, vector<16x16xbf16>, vector<16x16xf32> -> vector<16x16xf32>
    %cst_22 = arith.constant dense<0.000000e+00> : vector<16x16xf32>
    %38 = tpu.matmul %6, %36, %cst_22 {dimension_numbers = #tpu.dot_dimension_numbers<[1], [0], [0], [1], [0, 0, 1, 1], [], []>} : vector<16x16xbf16>, vector<16x16xbf16>, vector<16x16xf32> -> vector<16x16xf32>
    %39 = arith.addf %37, %38 : vector<16x16xf32>
    %cst_23 = arith.constant dense<0.000000e+00> : vector<16x16xf32>
    %40 = tpu.matmul %9, %33, %cst_23 {dimension_numbers = #tpu.dot_dimension_numbers<[1], [0], [0], [1], [0, 0, 1, 1], [], []>} : vector<16x16xbf16>, vector<16x16xbf16>, vector<16x16xf32> -> vector<16x16xf32>
    %41 = arith.addf %39, %40 : vector<16x16xf32>
    %42 = arith.mulf %3, %3 : vector<16x16xf32>
    %43 = arith.truncf %42 : vector<16x16xf32> to vector<16x16xbf16>
    %44 = arith.extf %43 : vector<16x16xbf16> to vector<16x16xf32>
    %45 = arith.subf %42, %44 : vector<16x16xf32>
    %46 = arith.truncf %45 : vector<16x16xf32> to vector<16x16xbf16>
    %cst_24 = arith.constant dense<0.000000e+00> : vector<16x16xf32>
    %47 = tpu.matmul %6, %43, %cst_24 {dimension_numbers = #tpu.dot_dimension_numbers<[1], [0], [0], [1], [0, 0, 1, 1], [], []>} : vector<16x16xbf16>, vector<16x16xbf16>, vector<16x16xf32> -> vector<16x16xf32>
    %cst_25 = arith.constant dense<0.000000e+00> : vector<16x16xf32>
    %48 = tpu.matmul %6, %46, %cst_25 {dimension_numbers = #tpu.dot_dimension_numbers<[1], [0], [0], [1], [0, 0, 1, 1], [], []>} : vector<16x16xbf16>, vector<16x16xbf16>, vector<16x16xf32> -> vector<16x16xf32>
    %49 = arith.addf %47, %48 : vector<16x16xf32>
    %cst_26 = arith.constant dense<0.000000e+00> : vector<16x16xf32>
    %50 = tpu.matmul %9, %43, %cst_26 {dimension_numbers = #tpu.dot_dimension_numbers<[1], [0], [0], [1], [0, 0, 1, 1], [], []>} : vector<16x16xbf16>, vector<16x16xbf16>, vector<16x16xf32> -> vector<16x16xf32>
    %51 = arith.addf %49, %50 : vector<16x16xf32>
    %52 = arith.mulf %1, %3 : vector<16x16xf32>
    %53 = arith.truncf %52 : vector<16x16xf32> to vector<16x16xbf16>
    %54 = arith.extf %53 : vector<16x16xbf16> to vector<16x16xf32>
    %55 = arith.subf %52, %54 : vector<16x16xf32>
    %56 = arith.truncf %55 : vector<16x16xf32> to vector<16x16xbf16>
    %cst_27 = arith.constant dense<0.000000e+00> : vector<16x16xf32>
    %57 = tpu.matmul %6, %53, %cst_27 {dimension_numbers = #tpu.dot_dimension_numbers<[1], [0], [0], [1], [0, 0, 1, 1], [], []>} : vector<16x16xbf16>, vector<16x16xbf16>, vector<16x16xf32> -> vector<16x16xf32>
    %cst_28 = arith.constant dense<0.000000e+00> : vector<16x16xf32>
    %58 = tpu.matmul %6, %56, %cst_28 {dimension_numbers = #tpu.dot_dimension_numbers<[1], [0], [0], [1], [0, 0, 1, 1], [], []>} : vector<16x16xbf16>, vector<16x16xbf16>, vector<16x16xf32> -> vector<16x16xf32>
    %59 = arith.addf %57, %58 : vector<16x16xf32>
    %cst_29 = arith.constant dense<0.000000e+00> : vector<16x16xf32>
    %60 = tpu.matmul %9, %53, %cst_29 {dimension_numbers = #tpu.dot_dimension_numbers<[1], [0], [0], [1], [0, 0, 1, 1], [], []>} : vector<16x16xbf16>, vector<16x16xbf16>, vector<16x16xf32> -> vector<16x16xf32>
    %61 = arith.addf %59, %60 : vector<16x16xf32>
    %62 = arith.truncf %22 : vector<16x16xf32> to vector<16x16xbf16>
    %63 = arith.extf %62 : vector<16x16xbf16> to vector<16x16xf32>
    %64 = arith.subf %22, %63 : vector<16x16xf32>
    %65 = arith.truncf %64 : vector<16x16xf32> to vector<16x16xbf16>
    %cst_30 = arith.constant dense<0.000000e+00> : vector<16x16xf32>
    %66 = tpu.matmul %62, %11, %cst_30 {dimension_numbers = #tpu.dot_dimension_numbers<[1], [0], [0], [1], [0, 0, 1, 1], [], []>} : vector<16x16xbf16>, vector<16x16xbf16>, vector<16x16xf32> -> vector<16x16xf32>
    %cst_31 = arith.constant dense<0.000000e+00> : vector<16x16xf32>
    %67 = tpu.matmul %62, %13, %cst_31 {dimension_numbers = #tpu.dot_dimension_numbers<[1], [0], [0], [1], [0, 0, 1, 1], [], []>} : vector<16x16xbf16>, vector<16x16xbf16>, vector<16x16xf32> -> vector<16x16xf32>
    %68 = arith.addf %66, %67 : vector<16x16xf32>
    %cst_32 = arith.constant dense<0.000000e+00> : vector<16x16xf32>
    %69 = tpu.matmul %65, %11, %cst_32 {dimension_numbers = #tpu.dot_dimension_numbers<[1], [0], [0], [1], [0, 0, 1, 1], [], []>} : vector<16x16xbf16>, vector<16x16xbf16>, vector<16x16xf32> -> vector<16x16xf32>
    %70 = arith.addf %68, %69 : vector<16x16xf32>
    %71 = arith.truncf %31 : vector<16x16xf32> to vector<16x16xbf16>
    %72 = arith.extf %71 : vector<16x16xbf16> to vector<16x16xf32>
    %73 = arith.subf %31, %72 : vector<16x16xf32>
    %74 = arith.truncf %73 : vector<16x16xf32> to vector<16x16xbf16>
    %cst_33 = arith.constant dense<0.000000e+00> : vector<16x16xf32>
    %75 = tpu.matmul %71, %11, %cst_33 {dimension_numbers = #tpu.dot_dimension_numbers<[1], [0], [0], [1], [0, 0, 1, 1], [], []>} : vector<16x16xbf16>, vector<16x16xbf16>, vector<16x16xf32> -> vector<16x16xf32>
    %cst_34 = arith.constant dense<0.000000e+00> : vector<16x16xf32>
    %76 = tpu.matmul %71, %13, %cst_34 {dimension_numbers = #tpu.dot_dimension_numbers<[1], [0], [0], [1], [0, 0, 1, 1], [], []>} : vector<16x16xbf16>, vector<16x16xbf16>, vector<16x16xf32> -> vector<16x16xf32>
    %77 = arith.addf %75, %76 : vector<16x16xf32>
    %cst_35 = arith.constant dense<0.000000e+00> : vector<16x16xf32>
    %78 = tpu.matmul %74, %11, %cst_35 {dimension_numbers = #tpu.dot_dimension_numbers<[1], [0], [0], [1], [0, 0, 1, 1], [], []>} : vector<16x16xbf16>, vector<16x16xbf16>, vector<16x16xf32> -> vector<16x16xf32>
    %79 = arith.addf %77, %78 : vector<16x16xf32>
    %80 = arith.mulf %70, %70 : vector<16x16xf32>
    %81 = arith.mulf %79, %79 : vector<16x16xf32>
    %82 = arith.mulf %70, %79 : vector<16x16xf32>
    %83 = arith.truncf %41 : vector<16x16xf32> to vector<16x16xbf16>
    %84 = arith.extf %83 : vector<16x16xbf16> to vector<16x16xf32>
    %85 = arith.subf %41, %84 : vector<16x16xf32>
    %86 = arith.truncf %85 : vector<16x16xf32> to vector<16x16xbf16>
    %cst_36 = arith.constant dense<0.000000e+00> : vector<16x16xf32>
    %87 = tpu.matmul %83, %11, %cst_36 {dimension_numbers = #tpu.dot_dimension_numbers<[1], [0], [0], [1], [0, 0, 1, 1], [], []>} : vector<16x16xbf16>, vector<16x16xbf16>, vector<16x16xf32> -> vector<16x16xf32>
    %cst_37 = arith.constant dense<0.000000e+00> : vector<16x16xf32>
    %88 = tpu.matmul %83, %13, %cst_37 {dimension_numbers = #tpu.dot_dimension_numbers<[1], [0], [0], [1], [0, 0, 1, 1], [], []>} : vector<16x16xbf16>, vector<16x16xbf16>, vector<16x16xf32> -> vector<16x16xf32>
    %89 = arith.addf %87, %88 : vector<16x16xf32>
    %cst_38 = arith.constant dense<0.000000e+00> : vector<16x16xf32>
    %90 = tpu.matmul %86, %11, %cst_38 {dimension_numbers = #tpu.dot_dimension_numbers<[1], [0], [0], [1], [0, 0, 1, 1], [], []>} : vector<16x16xbf16>, vector<16x16xbf16>, vector<16x16xf32> -> vector<16x16xf32>
    %91 = arith.addf %89, %90 : vector<16x16xf32>
    %92 = arith.subf %91, %80 : vector<16x16xf32>
    %93 = arith.truncf %51 : vector<16x16xf32> to vector<16x16xbf16>
    %94 = arith.extf %93 : vector<16x16xbf16> to vector<16x16xf32>
    %95 = arith.subf %51, %94 : vector<16x16xf32>
    %96 = arith.truncf %95 : vector<16x16xf32> to vector<16x16xbf16>
    %cst_39 = arith.constant dense<0.000000e+00> : vector<16x16xf32>
    %97 = tpu.matmul %93, %11, %cst_39 {dimension_numbers = #tpu.dot_dimension_numbers<[1], [0], [0], [1], [0, 0, 1, 1], [], []>} : vector<16x16xbf16>, vector<16x16xbf16>, vector<16x16xf32> -> vector<16x16xf32>
    %cst_40 = arith.constant dense<0.000000e+00> : vector<16x16xf32>
    %98 = tpu.matmul %93, %13, %cst_40 {dimension_numbers = #tpu.dot_dimension_numbers<[1], [0], [0], [1], [0, 0, 1, 1], [], []>} : vector<16x16xbf16>, vector<16x16xbf16>, vector<16x16xf32> -> vector<16x16xf32>
    %99 = arith.addf %97, %98 : vector<16x16xf32>
    %cst_41 = arith.constant dense<0.000000e+00> : vector<16x16xf32>
    %100 = tpu.matmul %96, %11, %cst_41 {dimension_numbers = #tpu.dot_dimension_numbers<[1], [0], [0], [1], [0, 0, 1, 1], [], []>} : vector<16x16xbf16>, vector<16x16xbf16>, vector<16x16xf32> -> vector<16x16xf32>
    %101 = arith.addf %99, %100 : vector<16x16xf32>
    %102 = arith.subf %101, %81 : vector<16x16xf32>
    %103 = arith.truncf %61 : vector<16x16xf32> to vector<16x16xbf16>
    %104 = arith.extf %103 : vector<16x16xbf16> to vector<16x16xf32>
    %105 = arith.subf %61, %104 : vector<16x16xf32>
    %106 = arith.truncf %105 : vector<16x16xf32> to vector<16x16xbf16>
    %cst_42 = arith.constant dense<0.000000e+00> : vector<16x16xf32>
    %107 = tpu.matmul %103, %11, %cst_42 {dimension_numbers = #tpu.dot_dimension_numbers<[1], [0], [0], [1], [0, 0, 1, 1], [], []>} : vector<16x16xbf16>, vector<16x16xbf16>, vector<16x16xf32> -> vector<16x16xf32>
    %cst_43 = arith.constant dense<0.000000e+00> : vector<16x16xf32>
    %108 = tpu.matmul %103, %13, %cst_43 {dimension_numbers = #tpu.dot_dimension_numbers<[1], [0], [0], [1], [0, 0, 1, 1], [], []>} : vector<16x16xbf16>, vector<16x16xbf16>, vector<16x16xf32> -> vector<16x16xf32>
    %109 = arith.addf %107, %108 : vector<16x16xf32>
    %cst_44 = arith.constant dense<0.000000e+00> : vector<16x16xf32>
    %110 = tpu.matmul %106, %11, %cst_44 {dimension_numbers = #tpu.dot_dimension_numbers<[1], [0], [0], [1], [0, 0, 1, 1], [], []>} : vector<16x16xbf16>, vector<16x16xbf16>, vector<16x16xf32> -> vector<16x16xf32>
    %111 = arith.addf %109, %110 : vector<16x16xf32>
    %112 = arith.subf %111, %82 : vector<16x16xf32>
    %cst_45 = arith.constant 2.000000e+00 : f32
    %113 = vector.broadcast %cst_45 : f32 to vector<16x16xf32>
    %114 = arith.mulf %113, %82 : vector<16x16xf32>
    %cst_46 = arith.constant 9.99999974E-5 : f32
    %115 = vector.broadcast %cst_46 : f32 to vector<16x16xf32>
    %116 = arith.addf %114, %115 : vector<16x16xf32>
    %cst_47 = arith.constant 2.000000e+00 : f32
    %117 = vector.broadcast %cst_47 : f32 to vector<16x16xf32>
    %118 = arith.mulf %117, %112 : vector<16x16xf32>
    %cst_48 = arith.constant 8.99999984E-4 : f32
    %119 = vector.broadcast %cst_48 : f32 to vector<16x16xf32>
    %120 = arith.addf %118, %119 : vector<16x16xf32>
    %121 = arith.mulf %116, %120 : vector<16x16xf32>
    %122 = arith.addf %80, %81 : vector<16x16xf32>
    %cst_49 = arith.constant 9.99999974E-5 : f32
    %123 = vector.broadcast %cst_49 : f32 to vector<16x16xf32>
    %124 = arith.addf %122, %123 : vector<16x16xf32>
    %125 = arith.addf %92, %102 : vector<16x16xf32>
    %cst_50 = arith.constant 8.99999984E-4 : f32
    %126 = vector.broadcast %cst_50 : f32 to vector<16x16xf32>
    %127 = arith.addf %125, %126 : vector<16x16xf32>
    %128 = arith.mulf %124, %127 : vector<16x16xf32>
    %cst_51 = arith.constant 9.99999996E-13 : f32
    %129 = vector.broadcast %cst_51 : f32 to vector<16x16xf32>
    %130 = arith.addf %128, %129 : vector<16x16xf32>
    %131 = tpu.reciprocal %130 {approx = true} : vector<16x16xf32> -> vector<16x16xf32>
    %132 = arith.mulf %130, %131 : vector<16x16xf32>
    %cst_52 = arith.constant 2.000000e+00 : f32
    %133 = vector.broadcast %cst_52 : f32 to vector<16x16xf32>
    %134 = arith.subf %133, %132 : vector<16x16xf32>
    %135 = arith.mulf %131, %134 : vector<16x16xf32>
    %136 = arith.mulf %121, %135 : vector<16x16xf32>
    %cst_53 = arith.constant dense<0.000000e+00> : vector<16xf32>
    %137 = vector.multi_reduction <add>, %136, %cst_53 [0] : vector<16x16xf32> to vector<16xf32>
    %138 = vector.shape_cast %137 : vector<16xf32> to vector<1x16xf32>
    %c0_54 = arith.constant 0 : index
    %c0_55 = arith.constant 0 : index
    %c0_56 = arith.constant 0 : index
    %c0_57 = arith.constant 0 : index
    %139 = vector.load %arg6[%c0_54, %c0_55, %c0_56, %c0_57] : memref<1x1x1x16xf32, #tpu.memory_space<vmem>>, vector<1x1x1x16xf32>
    %140 = vector.shape_cast %139 : vector<1x1x1x16xf32> to vector<1x16xf32>
    %141 = vector.shape_cast %138 : vector<1x16xf32> to vector<1x1x1x16xf32>
    tpu.vector_store %arg6[%c0_54, %c0_55, %c0_56, %c0_57], %141 {strides = array<i32>} : memref<1x1x1x16xf32, #tpu.memory_space<vmem>>, vector<1x1x1x16xf32>,
    return
  }
  func.func @transform_0(%arg0: i32, %arg1: i32) -> (i32, i32, i32) {
    %c0_i32 = arith.constant 0 : i32
    %c0_i32_0 = arith.constant 0 : i32
    %c0_i32_1 = arith.constant 0 : i32
    return %arg0, %c0_i32, %c0_i32_0 : i32, i32, i32
  }
  func.func @transform_1(%arg0: i32, %arg1: i32) -> (i32, i32, i32) {
    %c0_i32 = arith.constant 0 : i32
    %c0_i32_0 = arith.constant 0 : i32
    %c0_i32_1 = arith.constant 0 : i32
    return %arg0, %c0_i32, %c0_i32_0 : i32, i32, i32
  }
  func.func @transform_2(%arg0: i32, %arg1: i32) -> (i32, i32, i32, i32) {
    %c0_i32 = arith.constant 0 : i32
    %c0_i32_0 = arith.constant 0 : i32
    %c0_i32_1 = arith.constant 0 : i32
    %c0_i32_2 = arith.constant 0 : i32
    %c0_i32_3 = arith.constant 0 : i32
    return %c0_i32, %c0_i32_0, %c0_i32_1, %c0_i32_2 : i32, i32, i32, i32
  }
  func.func @transform_3(%arg0: i32, %arg1: i32) -> (i32, i32, i32) {
    %c0_i32 = arith.constant 0 : i32
    %c0_i32_0 = arith.constant 0 : i32
    %c0_i32_1 = arith.constant 0 : i32
    %c0_i32_2 = arith.constant 0 : i32
    return %c0_i32, %c0_i32_0, %c0_i32_1 : i32, i32, i32
  }
  func.func @transform_4(%arg0: i32, %arg1: i32) -> (i32, i32, i32, i32) {
    %c0_i32 = arith.constant 0 : i32
    %c0_i32_0 = arith.constant 0 : i32
    %c0_i32_1 = arith.constant 0 : i32
    return %arg0, %arg1, %c0_i32, %c0_i32_0 : i32, i32, i32, i32
  }
}

</mosaic_0001>

<llo_original>
// kernel: tpu_custom_call.1
$region0: #{tpu_custom_call.1}
  #allocation0 [shape = 'u32[]', space=smem, size = 0x4, offset = 0x4, fixed_abs, tag = 'smem constant byte address 0x4 - core index']
  #allocation1 [shape = 'u32[144,128]{1,0:T(1,128)}', space=vmem, size = 0x12000, scoped, tag = 'internal scratch']
  %s0 = inlined_call_operand.hbm [shape: f32[6,16,16], index: 0, kind: input, shape index: {}]
  %s1 = inlined_call_operand.hbm [shape: f32[6,16,16], index: 1, kind: input, shape index: {}]
  %s2 = inlined_call_operand.hbm [shape: bf16[2,1,16,16], index: 2, kind: input, shape index: {}]
  %s3 = inlined_call_operand.hbm [shape: bf16[2,16,16], index: 3, kind: input, shape index: {}]
  %s4 = inlined_call_operand.hbm [shape: f32[6,1,1,16], index: 4, kind: output, shape index: {}]
  %s5 = sld [smem:[#allocation0]]
  $region65: #{tpu_custom_call.1} parent=0
    _
  %s7 = ssub.s32 1, %s5
  %s8 = scalar_select 0, %s7, %s5
  $region1: #{tpu_custom_call.1} parent=0
    #allocation2 [shape = 'u8[16384]{0}', space=vmem, size = 0x4000, scoped, tag = 'input window, operand 0']
    #allocation3 [shape = 's32[2]{0}', space=sflag, size = 0x8, scoped, tag = 'scoped memory for tpu_custom_call.1']
    #allocation4 [shape = 's32[2]{0}', space=sflag, size = 0x8, scoped, tag = 'scoped memory for tpu_custom_call.1']
    #allocation5 [shape = 'u8[16384]{0}', space=vmem, size = 0x4000, scoped, tag = 'input window, operand 1']
    #allocation6 [shape = 's32[2]{0}', space=sflag, size = 0x8, scoped, tag = 'scoped memory for tpu_custom_call.1']
    #allocation7 [shape = 'u8[8192]{0}', space=vmem, size = 0x2000, scoped, tag = 'input window, operand 2, single buffered']
    #allocation8 [shape = 'u8[8192]{0}', space=vmem, size = 0x2000, scoped, tag = 'input window, operand 3, single buffered']
    #allocation9 [shape = 's32[1]{0}', space=sflag, size = 0x4, scoped, tag = 'scoped memory for tpu_custom_call.1']
    #allocation10 [shape = 'u8[1024]{0}', space=vmem, size = 0x400, scoped, tag = 'output window, operand 0']
    %9 = vsyncpa [#allocation3], 0
    %s10 = scalar_lea.sflag [#allocation3], 1
    %11 = vsyncpa %s10, 0
    %12 = vsyncpa [#allocation6], 0
    %s13 = scalar_lea.sflag [#allocation6], 1
    %14 = vsyncpa %s13, 0
    %15 = vsyncpa [#allocation9], 0
    %16 = vsyncpa [#allocation4], 0
    %s17 = scalar_lea.sflag [#allocation4], 1
    %18 = vsyncpa %s17, 0
    loop: start=0, step=1, limit=8
    $region2: #{tpu_custom_call.1} parent=1 // loop_pre_header
      _
    $region3: #{tpu_custom_call.1} parent=1 // loop_header
      %s20 = sphi 0, %s24
      %p21 = scmp.ge.s32.totalorder %s20, 8
      %s27 = sphi 0, %s39
      %s28 = sphi 0, %s35
      %s29 = sphi 0, %s27
      %s30 = sphi 0, %s28
      %s31 = sphi 0, %s29
      %s32 = sphi 0, %s30
      %s42 = sphi 0, %s44
      %s45 = sphi 0, %s42
      %s46 = sphi 0, %s45
      %s62 = sphi 0, %s46
      %s68 = sphi 0, %s70
      %s71 = sphi 0, %s68
      %s72 = sphi 0, %s71
      %s88 = sphi 0, %s72
      %s92 = sphi 0, %s92
      %s94 = sphi 0, %s92
      %s95 = sphi 0, %s94
      %s109 = sphi 0, %s95
      %s113 = sphi 0, %s113
      %s115 = sphi 0, %s113
      %s116 = sphi 0, %s115
      %s130 = sphi 0, %s116
      %s138 = sphi 0, %s140
      %s141 = sphi 0, %s138
      %s142 = sphi 0, %s141
      %s158 = sphi 0, %s142
    $region4: #{tpu_custom_call.1} parent=1 // loop_header_branch
      %23 = sbr.rel (%p21) target = $region8
    $region5: #{tpu_custom_call.1} parent=1 // loop_body
      %s25 = ssub.s32 %s20, 1
      %s26 = ssub.s32 %s20, 2
      %s33 = sadd.s32 1, %s28
      %p34 = scmp.ge.s32.totalorder %s33, 1
      %s35 = scalar_select %p34, 0, %s33
      %s36 = sadd.s32 1, %s27
      %s37 = scalar_select %p34, %s36, %s27
      %p38 = scmp.ge.s32.totalorder %s37, 6
      %s39 = scalar_select %p38, 0, %s37
      %s40 = ssub.s32 %s27, %s39
      %p41 = scmp.eq.s32.totalorder %s40, 0
      %s43 = sadd.s32 %s42, 1
      %s44 = scalar_select %p41, %s42, %s43
      %p47 = pneg %p41
      %p48 = scmp.eq.s32.totalorder %s20, 5
      %p49 = por %p47, %p48
      %p50 = scmp.ne.s32.totalorder %s42, %s45
      %p51 = scmp.eq.s32.totalorder %s20, 0
      %p52 = por %p50, %p51
      %p53 = scmp.ne.s32.totalorder %s42, %s45
      %p54 = scmp.eq.s32.totalorder %s25, 5
      %p55 = por %p53, %p54
      %p56 = scmp.ne.s32.totalorder %s45, %s46
      %p57 = scmp.eq.s32.totalorder %s25, 0
      %p58 = por %p56, %p57
      %p59 = scmp.ne.s32.totalorder %s45, %s46
      %p60 = scmp.eq.s32.totalorder %s26, 5
      %p61 = por %p59, %p60
      %p63 = scmp.ne.s32.totalorder %s46, %s62
      %p64 = scmp.eq.s32.totalorder %s26, 0
      %p65 = por %p63, %p64
      %s66 = ssub.s32 %s27, %s39
      %p67 = scmp.eq.s32.totalorder %s66, 0
      %s69 = sadd.s32 %s68, 1
      %s70 = scalar_select %p67, %s68, %s69
      %p73 = pneg %p67
      %p74 = scmp.eq.s32.totalorder %s20, 5
      %p75 = por %p73, %p74
      %p76 = scmp.ne.s32.totalorder %s68, %s71
      %p77 = scmp.eq.s32.totalorder %s20, 0
      %p78 = por %p76, %p77
      %p79 = scmp.ne.s32.totalorder %s68, %s71
      %p80 = scmp.eq.s32.totalorder %s25, 5
      %p81 = por %p79, %p80
      %p82 = scmp.ne.s32.totalorder %s71, %s72
      %p83 = scmp.eq.s32.totalorder %s25, 0
      %p84 = por %p82, %p83
      %p85 = scmp.ne.s32.totalorder %s71, %s72
      %p86 = scmp.eq.s32.totalorder %s26, 5
      %p87 = por %p85, %p86
      %p89 = scmp.ne.s32.totalorder %s72, %s88
      %p90 = scmp.eq.s32.totalorder %s26, 0
      %p91 = por %p89, %p90
      %s93 = sadd.s32 %s92, 1
      %p96 = scmp.eq.s32.totalorder %s20, 5
      %p97 = scmp.ne.s32.totalorder %s92, %s94
      %p98 = scmp.eq.s32.totalorder %s20, 0
      %p99 = por %p97, %p98
      %p100 = scmp.ne.s32.totalorder %s92, %s94
      %p101 = scmp.eq.s32.totalorder %s25, 5
      %p102 = por %p100, %p101
      %p103 = scmp.ne.s32.totalorder %s94, %s95
      %p104 = scmp.eq.s32.totalorder %s25, 0
      %p105 = por %p103, %p104
      %p106 = scmp.ne.s32.totalorder %s94, %s95
      %p107 = scmp.eq.s32.totalorder %s26, 5
      %p108 = por %p106, %p107
      %p110 = scmp.ne.s32.totalorder %s95, %s109
      %p111 = scmp.eq.s32.totalorder %s26, 0
      %p112 = por %p110, %p111
      %s114 = sadd.s32 %s113, 1
      %p117 = scmp.eq.s32.totalorder %s20, 5
      %p118 = scmp.ne.s32.totalorder %s113, %s115
      %p119 = scmp.eq.s32.totalorder %s20, 0
      %p120 = por %p118, %p119
      %p121 = scmp.ne.s32.totalorder %s113, %s115
      %p122 = scmp.eq.s32.totalorder %s25, 5
      %p123 = por %p121, %p122
      %p124 = scmp.ne.s32.totalorder %s115, %s116
      %p125 = scmp.eq.s32.totalorder %s25, 0
      %p126 = por %p124, %p125
      %p127 = scmp.ne.s32.totalorder %s115, %s116
      %p128 = scmp.eq.s32.totalorder %s26, 5
      %p129 = por %p127, %p128
      %p131 = scmp.ne.s32.totalorder %s116, %s130
      %p132 = scmp.eq.s32.totalorder %s26, 0
      %p133 = por %p131, %p132
      %s134 = ssub.s32 %s27, %s39
      %s135 = ssub.s32 %s28, %s35
      %s136 = sor.u32 %s134, %s135
      %p137 = scmp.eq.s32.totalorder %s136, 0
      %s139 = sadd.s32 %s138, 1
      %s140 = scalar_select %p137, %s138, %s139
      %p143 = pneg %p137
      %p144 = scmp.eq.s32.totalorder %s20, 5
      %p145 = por %p143, %p144
      %p146 = scmp.ne.s32.totalorder %s138, %s141
      %p147 = scmp.eq.s32.totalorder %s20, 0
      %p148 = por %p146, %p147
      %p149 = scmp.ne.s32.totalorder %s138, %s141
      %p150 = scmp.eq.s32.totalorder %s25, 5
      %p151 = por %p149, %p150
      %p152 = scmp.ne.s32.totalorder %s141, %s142
      %p153 = scmp.eq.s32.totalorder %s25, 0
      %p154 = por %p152, %p153
      %p155 = scmp.ne.s32.totalorder %s141, %s142
      %p156 = scmp.eq.s32.totalorder %s26, 5
      %p157 = por %p155, %p156
      %p159 = scmp.ne.s32.totalorder %s142, %s158
      %p160 = scmp.eq.s32.totalorder %s26, 0
      %p161 = por %p159, %p160
      %p162 = scmp.le.s32.totalorder 1, %s20
      %p163 = scmp.lt.s32.totalorder %s20, 7
      %p164 = pnand %p162, %p163
      %p165 = pneg %p164
      // Predicated region
      $region9: #{tpu_custom_call.1} parent=5 // pred_check
        _
      $region10: #{tpu_custom_call.1} parent=5 // pred_check_branch
        %167 = sbr.rel (%p164) target = $region12
      $region11: #{tpu_custom_call.1} parent=5 // pred_region
        %s168 = ssub.s32 %s20, 1
        // Predicated region
        $region13: #{tpu_custom_call.1} parent=11 // pred_check
          %p169 = pneg %p105
        $region14: #{tpu_custom_call.1} parent=11 // pred_check_branch
          %171 = sbr.rel (%p169) target = $region16
        $region15: #{tpu_custom_call.1} parent=11 // pred_region
          %s173 = ssub.s32 256, 256
          %174 = vsyncadd [#allocation6], %s173
          %s175 = sshll.u32 [#allocation7], 4
          %s176 = int_to_ptr.vmem [resolvable:$true] %s175
          %181 = dma.hbm_to_vmem [thread:$0]  %s2, 256, %s176, [#allocation6], 64, 64, 4
        $region16: #{tpu_custom_call.1} parent=11 // pred_fallthru
          _
        // Predicated region
        $region17: #{tpu_custom_call.1} parent=11 // pred_check
          %p182 = pneg %p126
        $region18: #{tpu_custom_call.1} parent=11 // pred_check_branch
          %184 = sbr.rel (%p182) target = $region20
        $region19: #{tpu_custom_call.1} parent=11 // pred_region
          %s186 = ssub.s32 256, 256
          %187 = vsyncadd [#allocation9], %s186
          %s188 = sshll.u32 [#allocation8], 4
          %s189 = int_to_ptr.vmem [resolvable:$true] %s188
          %194 = dma.hbm_to_vmem [thread:$0]  %s3, 256, %s189, [#allocation9], 64, 64, 4
        $region20: #{tpu_custom_call.1} parent=11 // pred_fallthru
          _
      $region12: #{tpu_custom_call.1} parent=5 // pred_fallthru
        _
      %p195 = scmp.lt.s32.totalorder %s20, 6
      // Predicated region
      $region21: #{tpu_custom_call.1} parent=5 // pred_check
        %p196 = pneg %p195
      $region22: #{tpu_custom_call.1} parent=5 // pred_check_branch
        %198 = sbr.rel (%p196) target = $region24
      $region23: #{tpu_custom_call.1} parent=5 // pred_region
        // Predicated region
        $region25: #{tpu_custom_call.1} parent=23 // pred_check
          %p199 = pneg %p52
        $region26: #{tpu_custom_call.1} parent=23 // pred_check_branch
          %201 = sbr.rel (%p199) target = $region28
        $region27: #{tpu_custom_call.1} parent=23 // pred_region
          %s202 = sand.u32 %s42, 1
          %s203 = scalar_lea.sflag [#allocation3], %s202
          %s204 = sand.u32 %s42, 1
          %s205 = smul.addr %s204, 16
          %s206 = scalar_lea.vmem [#allocation2], %s205
          %s208 = ssub.s32 256, 256
          %209 = vsyncadd %s203, %s208
          %s210 = smul.addr %s27, 2
          %s211 = smul.addr %s210, 128
          %s212 = scalar_lea.hbm %s0, %s211
          %s213 = sshll.u32 %s206, 4
          %s214 = int_to_ptr.vmem [resolvable:$true] %s213
          %219 = dma.hbm_to_vmem [thread:$0]  %s212, 256, %s214, %s203, 128, 128, 8
        $region28: #{tpu_custom_call.1} parent=23 // pred_fallthru
          _
        // Predicated region
        $region29: #{tpu_custom_call.1} parent=23 // pred_check
          %p220 = pneg %p78
        $region30: #{tpu_custom_call.1} parent=23 // pred_check_branch
          %222 = sbr.rel (%p220) target = $region32
        $region31: #{tpu_custom_call.1} parent=23 // pred_region
          %s223 = sand.u32 %s20, 1
          %s224 = scalar_lea.sflag [#allocation6], %s223
          %s225 = sand.u32 %s68, 1
          %s226 = smul.addr %s225, 16
          %s227 = scalar_lea.vmem [#allocation5], %s226
          %s229 = ssub.s32 256, 256
          %230 = vsyncadd %s224, %s229
          %s231 = smul.addr %s27, 2
          %s232 = smul.addr %s231, 128
          %s233 = scalar_lea.hbm %s1, %s232
          %s234 = sshll.u32 %s227, 4
          %s235 = int_to_ptr.vmem [resolvable:$true] %s234
          %240 = dma.hbm_to_vmem [thread:$0]  %s233, 256, %s235, %s224, 128, 128, 8
        $region32: #{tpu_custom_call.1} parent=23 // pred_fallthru
          _
      $region24: #{tpu_custom_call.1} parent=5 // pred_fallthru
        _
      %p241 = scmp.le.s32.totalorder 1, %s20
      %p242 = scmp.lt.s32.totalorder %s20, 7
      %p243 = pnand %p241, %p242
      %p244 = pneg %p243
      // Predicated region
      $region33: #{tpu_custom_call.1} parent=5 // pred_check
        _
      $region34: #{tpu_custom_call.1} parent=5 // pred_check_branch
        %246 = sbr.rel (%p243) target = $region36
      $region35: #{tpu_custom_call.1} parent=5 // pred_region
        %s247 = ssub.s32 %s20, 1
        %s248 = sand.u32 %s45, 1
        %s249 = scalar_lea.sflag [#allocation3], %s248
        %s250 = sand.u32 %s45, 1
        %s251 = smul.addr %s250, 16
        %s252 = scalar_lea.vmem [#allocation2], %s251
        // Predicated region
        $region37: #{tpu_custom_call.1} parent=35 // pred_check
          %p253 = pneg %p58
        $region38: #{tpu_custom_call.1} parent=35 // pred_check_branch
          %255 = sbr.rel (%p253) target = $region40
        $region39: #{tpu_custom_call.1} parent=35 // pred_region
          %256 = dma.done %s249, 256
        $region40: #{tpu_custom_call.1} parent=35 // pred_fallthru
          _
        %s257 = sand.u32 %s25, 1
        %s258 = scalar_lea.sflag [#allocation6], %s257
        %s259 = sand.u32 %s71, 1
        %s260 = smul.addr %s259, 16
        %s261 = scalar_lea.vmem [#allocation5], %s260
        // Predicated region
        $region41: #{tpu_custom_call.1} parent=35 // pred_check
          %p262 = pneg %p84
        $region42: #{tpu_custom_call.1} parent=35 // pred_check_branch
          %264 = sbr.rel (%p262) target = $region44
        $region43: #{tpu_custom_call.1} parent=35 // pred_region
          %265 = dma.done %s258, 256
        $region44: #{tpu_custom_call.1} parent=35 // pred_fallthru
          _
        // Predicated region
        $region45: #{tpu_custom_call.1} parent=35 // pred_check
          %p266 = pneg %p105
        $region46: #{tpu_custom_call.1} parent=35 // pred_check_branch
          %268 = sbr.rel (%p266) target = $region48
        $region47: #{tpu_custom_call.1} parent=35 // pred_region
          %269 = dma.done [#allocation6], 256
        $region48: #{tpu_custom_call.1} parent=35 // pred_fallthru
          _
        // Predicated region
        $region49: #{tpu_custom_call.1} parent=35 // pred_check
          %p270 = pneg %p126
        $region50: #{tpu_custom_call.1} parent=35 // pred_check_branch
          %272 = sbr.rel (%p270) target = $region52
        $region51: #{tpu_custom_call.1} parent=35 // pred_region
          %273 = dma.done [#allocation9], 256
        $region52: #{tpu_custom_call.1} parent=35 // pred_fallthru
          _
        %s274 = sand.u32 %s45, 1
        %s275 = scalar_lea.sflag [#allocation3], %s274
        %s276 = sand.u32 %s45, 1
        %s277 = smul.addr %s276, 16
        %s278 = scalar_lea.vmem [#allocation2], %s277
        %p279 = pneg %p58
        %p280 = pneg %p55
        %s281 = sand.u32 %s25, 1
        %s282 = scalar_lea.sflag [#allocation6], %s281
        %s283 = sand.u32 %s71, 1
        %s284 = smul.addr %s283, 16
        %s285 = scalar_lea.vmem [#allocation5], %s284
        %p286 = pneg %p84
        %p287 = pneg %p81
        %p288 = pneg %p105
        %p289 = pneg %p102
        %p290 = pneg %p126
        %p291 = pneg %p123
        %p292 = pneg %p154
        %p293 = pneg %p151
        %s294 = sand.u32 %s141, 1
        %s295 = scalar_lea.sflag [#allocation4], %s294
        %s296 = sand.u32 %s141, 1
        %s297 = scalar_lea.vmem [#allocation10], %s296
        %v299 = vld [vmem:[%s252] sm:$0xff]
        %v300 = vld [vmem:[%s252 + $0x8] sm:$0xff]
        %v301 = vld [vmem:[%s261] sm:$0xff]
        %v302 = vld [vmem:[%s261 + $0x8] sm:$0xff]
        %s303 = smul.u32 %s30, 2
        %s304 = smul.addr %s303, 4
        %s305 = scalar_lea.vmem [#allocation7], %s304
        %v306 = vld [vmem:[%s305] sm:$0xf]
        %v307 = vld [vmem:[%s305 + $0x4] sm:$0xf]
        %s308 = sadd.s32 %s303, 2
        %s309 = smul.addr %s308, 4
        %s310 = scalar_lea.vmem [#allocation7], %s309
        %v311 = vld [vmem:[%s310] sm:$0xf]
        %v312 = vld [vmem:[%s310 + $0x4] sm:$0xf]
        %v313 = vld [vmem:[#allocation8] sm:$0xf]
        %v314 = vld [vmem:[#allocation8 + $0x4] sm:$0xf]
        %s315 = scalar_lea.vmem [#allocation8], 8
        %v316 = vld [vmem:[%s315] sm:$0xf]
        %v317 = vld [vmem:[%s315 + $0x4] sm:$0xf]
        %v318 = vpack.c.bf16 %v300, %v299
        %v319 = vunpack.c.l.bf16 %v318
        %v320 = vunpack.c.h.bf16 %v318
        %v321 = vsub.f32 %v299, %v319
        %v322 = vsub.f32 %v300, %v320
        %v323 = vpack.c.bf16 %v322, %v321
        %v326 = vunpack.c.l.b16 %v306
        %v327 = vunpack.c.l.b16 %v307
        %v328 = vpack.c.b16 %v327, %v326
        %vm329 = vcmask 130048
        %v331 = vsel %vm329, %v328, 0
        %333 = vmatprep.subr.bf16.mxu0 0
        %334 = vmatpush1.bf16.msra.mxu0 %v323
        %335 = vmatprep.subr.bf16.mxu0 0
        %336 = vmatpush1.bf16.msra.mxu0 0
        %337 = vmatprep.subr.bf16.mxu0 0
        %338 = vmatpush1.bf16.msra.mxu0 0
        %339 = vmatprep.subr.bf16.mxu0 0
        %340 = vmatpush1.bf16.msra.mxu0 0
        %341 = vmatprep.subr.bf16.mxu0 0
        %342 = vmatpush1.bf16.msra.mxu0 0
        %343 = vmatprep.subr.bf16.mxu0 0
        %344 = vmatpush1.bf16.msra.mxu0 0
        %345 = vmatprep.subr.bf16.mxu0 0
        %346 = vmatpush1.bf16.msra.mxu0 0
        %347 = vmatprep.subr.bf16.mxu0 0
        %348 = vmatpush1.bf16.msra.mxu0 0
        %349 = vmatprep.subr.bf16.mxu0 0
        %350 = vmatpush1.bf16.msra.mxu0 0
        %351 = vmatprep.subr.bf16.mxu0 0
        %352 = vmatpush1.bf16.msra.mxu0 0
        %353 = vmatprep.subr.bf16.mxu0 0
        %354 = vmatpush1.bf16.msra.mxu0 0
        %355 = vmatprep.subr.bf16.mxu0 0
        %356 = vmatpush1.bf16.msra.mxu0 0
        %357 = vmatprep.subr.bf16.mxu0 0
        %358 = vmatpush1.bf16.msra.mxu0 0
        %359 = vmatprep.subr.bf16.mxu0 0
        %360 = vmatpush1.bf16.msra.mxu0 0
        %361 = vmatprep.subr.bf16.mxu0 0
        %362 = vmatpush1.bf16.msra.mxu0 0
        %363 = vmatprep.subr.bf16.mxu0 0
        %364 = vmatpush1.bf16.msra.mxu0 0
        %365 = vmatprep.mubr.bf16.mxu0 0
        %366 = vmatmul.mubr.bf16.gmra.mrb[0].mxu0 %v331
        %v367 = vpop.f32.mrb[0].mxu0
        %v368 = vadd.f32 0.0, %v367
        %v369 = vpop.f32.mrb[0].mxu0
        %v370 = vpop.f32.mrb[0].mxu0
        %v371 = vadd.f32 0.0, %v370
        %v372 = vpop.f32.mrb[0].mxu0
        %373 = vdwg.mxu0
        %374 = vmatprep.subr.bf16.mxu0 0
        %375 = vmatpush1.bf16.msra.mxu0 %v318
        %376 = vmatprep.subr.bf16.mxu0 0
        %377 = vmatpush1.bf16.msra.mxu0 0
        %378 = vmatprep.subr.bf16.mxu0 0
        %379 = vmatpush1.bf16.msra.mxu0 0
        %380 = vmatprep.subr.bf16.mxu0 0
        %381 = vmatpush1.bf16.msra.mxu0 0
        %382 = vmatprep.subr.bf16.mxu0 0
        %383 = vmatpush1.bf16.msra.mxu0 0
        %384 = vmatprep.subr.bf16.mxu0 0
        %385 = vmatpush1.bf16.msra.mxu0 0
        %386 = vmatprep.subr.bf16.mxu0 0
        %387 = vmatpush1.bf16.msra.mxu0 0
        %388 = vmatprep.subr.bf16.mxu0 0
        %389 = vmatpush1.bf16.msra.mxu0 0
        %390 = vmatprep.subr.bf16.mxu0 0
        %391 = vmatpush1.bf16.msra.mxu0 0
        %392 = vmatprep.subr.bf16.mxu0 0
        %393 = vmatpush1.bf16.msra.mxu0 0
        %394 = vmatprep.subr.bf16.mxu0 0
        %395 = vmatpush1.bf16.msra.mxu0 0
        %396 = vmatprep.subr.bf16.mxu0 0
        %397 = vmatpush1.bf16.msra.mxu0 0
        %398 = vmatprep.subr.bf16.mxu0 0
        %399 = vmatpush1.bf16.msra.mxu0 0
        %400 = vmatprep.subr.bf16.mxu0 0
        %401 = vmatpush1.bf16.msra.mxu0 0
        %402 = vmatprep.subr.bf16.mxu0 0
        %403 = vmatpush1.bf16.msra.mxu0 0
        %404 = vmatprep.subr.bf16.mxu0 0
        %405 = vmatpush1.bf16.msra.mxu0 0
        %406 = vmatprep.mubr.bf16.mxu0 0
        %407 = vmatmul.mubr.bf16.gmra.mrb[0].mxu0 %v331
        %v408 = vpop.f32.mrb[0].mxu0
        %v409 = vadd.f32 %v368, %v408
        %v410 = vpop.f32.mrb[0].mxu0
        %v411 = vpop.f32.mrb[0].mxu0
        %v412 = vadd.f32 %v371, %v411
        %v413 = vpop.f32.mrb[0].mxu0
        %414 = vdwg.mxu0
        %v417 = vunpack.c.l.b16 %v311
        %v418 = vunpack.c.l.b16 %v312
        %v419 = vpack.c.b16 %v418, %v417
        %v421 = vsel %vm329, %v419, 0
        %423 = vmatprep.subr.bf16.mxu0 0
        %424 = vmatpush1.bf16.msra.mxu0 %v318
        %425 = vmatprep.subr.bf16.mxu0 0
        %426 = vmatpush1.bf16.msra.mxu0 0
        %427 = vmatprep.subr.bf16.mxu0 0
        %428 = vmatpush1.bf16.msra.mxu0 0
        %429 = vmatprep.subr.bf16.mxu0 0
        %430 = vmatpush1.bf16.msra.mxu0 0
        %431 = vmatprep.subr.bf16.mxu0 0
        %432 = vmatpush1.bf16.msra.mxu0 0
        %433 = vmatprep.subr.bf16.mxu0 0
        %434 = vmatpush1.bf16.msra.mxu0 0
        %435 = vmatprep.subr.bf16.mxu0 0
        %436 = vmatpush1.bf16.msra.mxu0 0
        %437 = vmatprep.subr.bf16.mxu0 0
        %438 = vmatpush1.bf16.msra.mxu0 0
        %439 = vmatprep.subr.bf16.mxu0 0
        %440 = vmatpush1.bf16.msra.mxu0 0
        %441 = vmatprep.subr.bf16.mxu0 0
        %442 = vmatpush1.bf16.msra.mxu0 0
        %443 = vmatprep.subr.bf16.mxu0 0
        %444 = vmatpush1.bf16.msra.mxu0 0
        %445 = vmatprep.subr.bf16.mxu0 0
        %446 = vmatpush1.bf16.msra.mxu0 0
        %447 = vmatprep.subr.bf16.mxu0 0
        %448 = vmatpush1.bf16.msra.mxu0 0
        %449 = vmatprep.subr.bf16.mxu0 0
        %450 = vmatpush1.bf16.msra.mxu0 0
        %451 = vmatprep.subr.bf16.mxu0 0
        %452 = vmatpush1.bf16.msra.mxu0 0
        %453 = vmatprep.subr.bf16.mxu0 0
        %454 = vmatpush1.bf16.msra.mxu0 0
        %455 = vmatprep.mubr.bf16.mxu0 0
        %456 = vmatmul.mubr.bf16.gmra.mrb[0].mxu0 %v421
        %v457 = vpop.f32.mrb[0].mxu0
        %v458 = vadd.f32 0.0, %v457
        %v459 = vpop.f32.mrb[0].mxu0
        %v460 = vpop.f32.mrb[0].mxu0
        %v461 = vadd.f32 0.0, %v460
        %v462 = vpop.f32.mrb[0].mxu0
        %463 = vdwg.mxu0
        %v464 = vadd.f32 %v409, %v458
        %v465 = vadd.f32 %v412, %v461
        %v466 = vpack.c.bf16 %v302, %v301
        %v467 = vunpack.c.l.bf16 %v466
        %v468 = vunpack.c.h.bf16 %v466
        %v469 = vsub.f32 %v301, %v467
        %v470 = vsub.f32 %v302, %v468
        %v471 = vpack.c.bf16 %v470, %v469
        %472 = vmatprep.subr.bf16.mxu0 0
        %473 = vmatpush1.bf16.msra.mxu0 %v471
        %474 = vmatprep.subr.bf16.mxu0 0
        %475 = vmatpush1.bf16.msra.mxu0 0
        %476 = vmatprep.subr.bf16.mxu0 0
        %477 = vmatpush1.bf16.msra.mxu0 0
        %478 = vmatprep.subr.bf16.mxu0 0
        %479 = vmatpush1.bf16.msra.mxu0 0
        %480 = vmatprep.subr.bf16.mxu0 0
        %481 = vmatpush1.bf16.msra.mxu0 0
        %482 = vmatprep.subr.bf16.mxu0 0
        %483 = vmatpush1.bf16.msra.mxu0 0
        %484 = vmatprep.subr.bf16.mxu0 0
        %485 = vmatpush1.bf16.msra.mxu0 0
        %486 = vmatprep.subr.bf16.mxu0 0
        %487 = vmatpush1.bf16.msra.mxu0 0
        %488 = vmatprep.subr.bf16.mxu0 0
        %489 = vmatpush1.bf16.msra.mxu0 0
        %490 = vmatprep.subr.bf16.mxu0 0
        %491 = vmatpush1.bf16.msra.mxu0 0
        %492 = vmatprep.subr.bf16.mxu0 0
        %493 = vmatpush1.bf16.msra.mxu0 0
        %494 = vmatprep.subr.bf16.mxu0 0
        %495 = vmatpush1.bf16.msra.mxu0 0
        %496 = vmatprep.subr.bf16.mxu0 0
        %497 = vmatpush1.bf16.msra.mxu0 0
        %498 = vmatprep.subr.bf16.mxu0 0
        %499 = vmatpush1.bf16.msra.mxu0 0
        %500 = vmatprep.subr.bf16.mxu0 0
        %501 = vmatpush1.bf16.msra.mxu0 0
        %502 = vmatprep.subr.bf16.mxu0 0
        %503 = vmatpush1.bf16.msra.mxu0 0
        %504 = vmatprep.mubr.bf16.mxu0 0
        %505 = vmatmul.mubr.bf16.gmra.mrb[0].mxu0 %v331
        %v506 = vpop.f32.mrb[0].mxu0
        %v507 = vadd.f32 0.0, %v506
        %v508 = vpop.f32.mrb[0].mxu0
        %v509 = vpop.f32.mrb[0].mxu0
        %v510 = vadd.f32 0.0, %v509
        %v511 = vpop.f32.mrb[0].mxu0
        %512 = vdwg.mxu0
        %513 = vmatprep.subr.bf16.mxu0 0
        %514 = vmatpush1.bf16.msra.mxu0 %v466
        %515 = vmatprep.subr.bf16.mxu0 0
        %516 = vmatpush1.bf16.msra.mxu0 0
        %517 = vmatprep.subr.bf16.mxu0 0
        %518 = vmatpush1.bf16.msra.mxu0 0
        %519 = vmatprep.subr.bf16.mxu0 0
        %520 = vmatpush1.bf16.msra.mxu0 0
        %521 = vmatprep.subr.bf16.mxu0 0
        %522 = vmatpush1.bf16.msra.mxu0 0
        %523 = vmatprep.subr.bf16.mxu0 0
        %524 = vmatpush1.bf16.msra.mxu0 0
        %525 = vmatprep.subr.bf16.mxu0 0
        %526 = vmatpush1.bf16.msra.mxu0 0
        %527 = vmatprep.subr.bf16.mxu0 0
        %528 = vmatpush1.bf16.msra.mxu0 0
        %529 = vmatprep.subr.bf16.mxu0 0
        %530 = vmatpush1.bf16.msra.mxu0 0
        %531 = vmatprep.subr.bf16.mxu0 0
        %532 = vmatpush1.bf16.msra.mxu0 0
        %533 = vmatprep.subr.bf16.mxu0 0
        %534 = vmatpush1.bf16.msra.mxu0 0
        %535 = vmatprep.subr.bf16.mxu0 0
        %536 = vmatpush1.bf16.msra.mxu0 0
        %537 = vmatprep.subr.bf16.mxu0 0
        %538 = vmatpush1.bf16.msra.mxu0 0
        %539 = vmatprep.subr.bf16.mxu0 0
        %540 = vmatpush1.bf16.msra.mxu0 0
        %541 = vmatprep.subr.bf16.mxu0 0
        %542 = vmatpush1.bf16.msra.mxu0 0
        %543 = vmatprep.subr.bf16.mxu0 0
        %544 = vmatpush1.bf16.msra.mxu0 0
        %545 = vmatprep.mubr.bf16.mxu0 0
        %546 = vmatmul.mubr.bf16.gmra.mrb[0].mxu0 %v331
        %v547 = vpop.f32.mrb[0].mxu0
        %v548 = vadd.f32 %v507, %v547
        %v549 = vpop.f32.mrb[0].mxu0
        %v550 = vpop.f32.mrb[0].mxu0
        %v551 = vadd.f32 %v510, %v550
        %v552 = vpop.f32.mrb[0].mxu0
        %553 = vdwg.mxu0
        %554 = vmatprep.subr.bf16.mxu0 0
        %555 = vmatpush1.bf16.msra.mxu0 %v466
        %556 = vmatprep.subr.bf16.mxu0 0
        %557 = vmatpush1.bf16.msra.mxu0 0
        %558 = vmatprep.subr.bf16.mxu0 0
        %559 = vmatpush1.bf16.msra.mxu0 0
        %560 = vmatprep.subr.bf16.mxu0 0
        %561 = vmatpush1.bf16.msra.mxu0 0
        %562 = vmatprep.subr.bf16.mxu0 0
        %563 = vmatpush1.bf16.msra.mxu0 0
        %564 = vmatprep.subr.bf16.mxu0 0
        %565 = vmatpush1.bf16.msra.mxu0 0
        %566 = vmatprep.subr.bf16.mxu0 0
        %567 = vmatpush1.bf16.msra.mxu0 0
        %568 = vmatprep.subr.bf16.mxu0 0
        %569 = vmatpush1.bf16.msra.mxu0 0
        %570 = vmatprep.subr.bf16.mxu0 0
        %571 = vmatpush1.bf16.msra.mxu0 0
        %572 = vmatprep.subr.bf16.mxu0 0
        %573 = vmatpush1.bf16.msra.mxu0 0
        %574 = vmatprep.subr.bf16.mxu0 0
        %575 = vmatpush1.bf16.msra.mxu0 0
        %576 = vmatprep.subr.bf16.mxu0 0
        %577 = vmatpush1.bf16.msra.mxu0 0
        %578 = vmatprep.subr.bf16.mxu0 0
        %579 = vmatpush1.bf16.msra.mxu0 0
        %580 = vmatprep.subr.bf16.mxu0 0
        %581 = vmatpush1.bf16.msra.mxu0 0
        %582 = vmatprep.subr.bf16.mxu0 0
        %583 = vmatpush1.bf16.msra.mxu0 0
        %584 = vmatprep.subr.bf16.mxu0 0
        %585 = vmatpush1.bf16.msra.mxu0 0
        %586 = vmatprep.mubr.bf16.mxu0 0
        %587 = vmatmul.mubr.bf16.gmra.mrb[0].mxu0 %v421
        %v588 = vpop.f32.mrb[0].mxu0
        %v589 = vadd.f32 0.0, %v588
        %v590 = vpop.f32.mrb[0].mxu0
        %v591 = vpop.f32.mrb[0].mxu0
        %v592 = vadd.f32 0.0, %v591
        %v593 = vpop.f32.mrb[0].mxu0
        %594 = vdwg.mxu0
        %v595 = vadd.f32 %v548, %v589
        %v596 = vadd.f32 %v551, %v592
        %v597 = vmul.f32 %v299, %v299
        %v598 = vmul.f32 %v300, %v300
        %v599 = vpack.c.bf16 %v598, %v597
        %v600 = vunpack.c.l.bf16 %v599
        %v601 = vunpack.c.h.bf16 %v599
        %v602 = vsub.f32 %v597, %v600
        %v603 = vsub.f32 %v598, %v601
        %v604 = vpack.c.bf16 %v603, %v602
        %605 = vmatprep.subr.bf16.mxu0 0
        %606 = vmatpush1.bf16.msra.mxu0 %v604
        %607 = vmatprep.subr.bf16.mxu0 0
        %608 = vmatpush1.bf16.msra.mxu0 0
        %609 = vmatprep.subr.bf16.mxu0 0
        %610 = vmatpush1.bf16.msra.mxu0 0
        %611 = vmatprep.subr.bf16.mxu0 0
        %612 = vmatpush1.bf16.msra.mxu0 0
        %613 = vmatprep.subr.bf16.mxu0 0
        %614 = vmatpush1.bf16.msra.mxu0 0
        %615 = vmatprep.subr.bf16.mxu0 0
        %616 = vmatpush1.bf16.msra.mxu0 0
        %617 = vmatprep.subr.bf16.mxu0 0
        %618 = vmatpush1.bf16.msra.mxu0 0
        %619 = vmatprep.subr.bf16.mxu0 0
        %620 = vmatpush1.bf16.msra.mxu0 0
        %621 = vmatprep.subr.bf16.mxu0 0
        %622 = vmatpush1.bf16.msra.mxu0 0
        %623 = vmatprep.subr.bf16.mxu0 0
        %624 = vmatpush1.bf16.msra.mxu0 0
        %625 = vmatprep.subr.bf16.mxu0 0
        %626 = vmatpush1.bf16.msra.mxu0 0
        %627 = vmatprep.subr.bf16.mxu0 0
        %628 = vmatpush1.bf16.msra.mxu0 0
        %629 = vmatprep.subr.bf16.mxu0 0
        %630 = vmatpush1.bf16.msra.mxu0 0
        %631 = vmatprep.subr.bf16.mxu0 0
        %632 = vmatpush1.bf16.msra.mxu0 0
        %633 = vmatprep.subr.bf16.mxu0 0
        %634 = vmatpush1.bf16.msra.mxu0 0
        %635 = vmatprep.subr.bf16.mxu0 0
        %636 = vmatpush1.bf16.msra.mxu0 0
        %637 = vmatprep.mubr.bf16.mxu0 0
        %638 = vmatmul.mubr.bf16.gmra.mrb[0].mxu0 %v331
        %v639 = vpop.f32.mrb[0].mxu0
        %v640 = vadd.f32 0.0, %v639
        %v641 = vpop.f32.mrb[0].mxu0
        %v642 = vpop.f32.mrb[0].mxu0
        %v643 = vadd.f32 0.0, %v642
        %v644 = vpop.f32.mrb[0].mxu0
        %645 = vdwg.mxu0
        %646 = vmatprep.subr.bf16.mxu0 0
        %647 = vmatpush1.bf16.msra.mxu0 %v599
        %648 = vmatprep.subr.bf16.mxu0 0
        %649 = vmatpush1.bf16.msra.mxu0 0
        %650 = vmatprep.subr.bf16.mxu0 0
        %651 = vmatpush1.bf16.msra.mxu0 0
        %652 = vmatprep.subr.bf16.mxu0 0
        %653 = vmatpush1.bf16.msra.mxu0 0
        %654 = vmatprep.subr.bf16.mxu0 0
        %655 = vmatpush1.bf16.msra.mxu0 0
        %656 = vmatprep.subr.bf16.mxu0 0
        %657 = vmatpush1.bf16.msra.mxu0 0
        %658 = vmatprep.subr.bf16.mxu0 0
        %659 = vmatpush1.bf16.msra.mxu0 0
        %660 = vmatprep.subr.bf16.mxu0 0
        %661 = vmatpush1.bf16.msra.mxu0 0
        %662 = vmatprep.subr.bf16.mxu0 0
        %663 = vmatpush1.bf16.msra.mxu0 0
        %664 = vmatprep.subr.bf16.mxu0 0
        %665 = vmatpush1.bf16.msra.mxu0 0
        %666 = vmatprep.subr.bf16.mxu0 0
        %667 = vmatpush1.bf16.msra.mxu0 0
        %668 = vmatprep.subr.bf16.mxu0 0
        %669 = vmatpush1.bf16.msra.mxu0 0
        %670 = vmatprep.subr.bf16.mxu0 0
        %671 = vmatpush1.bf16.msra.mxu0 0
        %672 = vmatprep.subr.bf16.mxu0 0
        %673 = vmatpush1.bf16.msra.mxu0 0
        %674 = vmatprep.subr.bf16.mxu0 0
        %675 = vmatpush1.bf16.msra.mxu0 0
        %676 = vmatprep.subr.bf16.mxu0 0
        %677 = vmatpush1.bf16.msra.mxu0 0
        %678 = vmatprep.mubr.bf16.mxu0 0
        %679 = vmatmul.mubr.bf16.gmra.mrb[0].mxu0 %v331
        %v680 = vpop.f32.mrb[0].mxu0
        %v681 = vadd.f32 %v640, %v680
        %v682 = vpop.f32.mrb[0].mxu0
        %v683 = vpop.f32.mrb[0].mxu0
        %v684 = vadd.f32 %v643, %v683
        %v685 = vpop.f32.mrb[0].mxu0
        %686 = vdwg.mxu0
        %687 = vmatprep.subr.bf16.mxu0 0
        %688 = vmatpush1.bf16.msra.mxu0 %v599
        %689 = vmatprep.subr.bf16.mxu0 0
        %690 = vmatpush1.bf16.msra.mxu0 0
        %691 = vmatprep.subr.bf16.mxu0 0
        %692 = vmatpush1.bf16.msra.mxu0 0
        %693 = vmatprep.subr.bf16.mxu0 0
        %694 = vmatpush1.bf16.msra.mxu0 0
        %695 = vmatprep.subr.bf16.mxu0 0
        %696 = vmatpush1.bf16.msra.mxu0 0
        %697 = vmatprep.subr.bf16.mxu0 0
        %698 = vmatpush1.bf16.msra.mxu0 0
        %699 = vmatprep.subr.bf16.mxu0 0
        %700 = vmatpush1.bf16.msra.mxu0 0
        %701 = vmatprep.subr.bf16.mxu0 0
        %702 = vmatpush1.bf16.msra.mxu0 0
        %703 = vmatprep.subr.bf16.mxu0 0
        %704 = vmatpush1.bf16.msra.mxu0 0
        %705 = vmatprep.subr.bf16.mxu0 0
        %706 = vmatpush1.bf16.msra.mxu0 0
        %707 = vmatprep.subr.bf16.mxu0 0
        %708 = vmatpush1.bf16.msra.mxu0 0
        %709 = vmatprep.subr.bf16.mxu0 0
        %710 = vmatpush1.bf16.msra.mxu0 0
        %711 = vmatprep.subr.bf16.mxu0 0
        %712 = vmatpush1.bf16.msra.mxu0 0
        %713 = vmatprep.subr.bf16.mxu0 0
        %714 = vmatpush1.bf16.msra.mxu0 0
        %715 = vmatprep.subr.bf16.mxu0 0
        %716 = vmatpush1.bf16.msra.mxu0 0
        %717 = vmatprep.subr.bf16.mxu0 0
        %718 = vmatpush1.bf16.msra.mxu0 0
        %719 = vmatprep.mubr.bf16.mxu0 0
        %720 = vmatmul.mubr.bf16.gmra.mrb[0].mxu0 %v421
        %v721 = vpop.f32.mrb[0].mxu0
        %v722 = vadd.f32 0.0, %v721
        %v723 = vpop.f32.mrb[0].mxu0
        %v724 = vpop.f32.mrb[0].mxu0
        %v725 = vadd.f32 0.0, %v724
        %v726 = vpop.f32.mrb[0].mxu0
        %727 = vdwg.mxu0
        %v728 = vadd.f32 %v681, %v722
        %v729 = vadd.f32 %v684, %v725
        %v730 = vmul.f32 %v301, %v301
        %v731 = vmul.f32 %v302, %v302
        %v732 = vpack.c.bf16 %v731, %v730
        %v733 = vunpack.c.l.bf16 %v732
        %v734 = vunpack.c.h.bf16 %v732
        %v735 = vsub.f32 %v730, %v733
        %v736 = vsub.f32 %v731, %v734
        %v737 = vpack.c.bf16 %v736, %v735
        %738 = vmatprep.subr.bf16.mxu0 0
        %739 = vmatpush1.bf16.msra.mxu0 %v737
        %740 = vmatprep.subr.bf16.mxu0 0
        %741 = vmatpush1.bf16.msra.mxu0 0
        %742 = vmatprep.subr.bf16.mxu0 0
        %743 = vmatpush1.bf16.msra.mxu0 0
        %744 = vmatprep.subr.bf16.mxu0 0
        %745 = vmatpush1.bf16.msra.mxu0 0
        %746 = vmatprep.subr.bf16.mxu0 0
        %747 = vmatpush1.bf16.msra.mxu0 0
        %748 = vmatprep.subr.bf16.mxu0 0
        %749 = vmatpush1.bf16.msra.mxu0 0
        %750 = vmatprep.subr.bf16.mxu0 0
        %751 = vmatpush1.bf16.msra.mxu0 0
        %752 = vmatprep.subr.bf16.mxu0 0
        %753 = vmatpush1.bf16.msra.mxu0 0
        %754 = vmatprep.subr.bf16.mxu0 0
        %755 = vmatpush1.bf16.msra.mxu0 0
        %756 = vmatprep.subr.bf16.mxu0 0
        %757 = vmatpush1.bf16.msra.mxu0 0
        %758 = vmatprep.subr.bf16.mxu0 0
        %759 = vmatpush1.bf16.msra.mxu0 0
        %760 = vmatprep.subr.bf16.mxu0 0
        %761 = vmatpush1.bf16.msra.mxu0 0
        %762 = vmatprep.subr.bf16.mxu0 0
        %763 = vmatpush1.bf16.msra.mxu0 0
        %764 = vmatprep.subr.bf16.mxu0 0
        %765 = vmatpush1.bf16.msra.mxu0 0
        %766 = vmatprep.subr.bf16.mxu0 0
        %767 = vmatpush1.bf16.msra.mxu0 0
        %768 = vmatprep.subr.bf16.mxu0 0
        %769 = vmatpush1.bf16.msra.mxu0 0
        %770 = vmatprep.mubr.bf16.mxu0 0
        %771 = vmatmul.mubr.bf16.gmra.mrb[0].mxu0 %v331
        %v772 = vpop.f32.mrb[0].mxu0
        %v773 = vadd.f32 0.0, %v772
        %v774 = vpop.f32.mrb[0].mxu0
        %v775 = vpop.f32.mrb[0].mxu0
        %v776 = vadd.f32 0.0, %v775
        %v777 = vpop.f32.mrb[0].mxu0
        %778 = vdwg.mxu0
        %779 = vmatprep.subr.bf16.mxu0 0
        %780 = vmatpush1.bf16.msra.mxu0 %v732
        %781 = vmatprep.subr.bf16.mxu0 0
        %782 = vmatpush1.bf16.msra.mxu0 0
        %783 = vmatprep.subr.bf16.mxu0 0
        %784 = vmatpush1.bf16.msra.mxu0 0
        %785 = vmatprep.subr.bf16.mxu0 0
        %786 = vmatpush1.bf16.msra.mxu0 0
        %787 = vmatprep.subr.bf16.mxu0 0
        %788 = vmatpush1.bf16.msra.mxu0 0
        %789 = vmatprep.subr.bf16.mxu0 0
        %790 = vmatpush1.bf16.msra.mxu0 0
        %791 = vmatprep.subr.bf16.mxu0 0
        %792 = vmatpush1.bf16.msra.mxu0 0
        %793 = vmatprep.subr.bf16.mxu0 0
        %794 = vmatpush1.bf16.msra.mxu0 0
        %795 = vmatprep.subr.bf16.mxu0 0
        %796 = vmatpush1.bf16.msra.mxu0 0
        %797 = vmatprep.subr.bf16.mxu0 0
        %798 = vmatpush1.bf16.msra.mxu0 0
        %799 = vmatprep.subr.bf16.mxu0 0
        %800 = vmatpush1.bf16.msra.mxu0 0
        %801 = vmatprep.subr.bf16.mxu0 0
        %802 = vmatpush1.bf16.msra.mxu0 0
        %803 = vmatprep.subr.bf16.mxu0 0
        %804 = vmatpush1.bf16.msra.mxu0 0
        %805 = vmatprep.subr.bf16.mxu0 0
        %806 = vmatpush1.bf16.msra.mxu0 0
        %807 = vmatprep.subr.bf16.mxu0 0
        %808 = vmatpush1.bf16.msra.mxu0 0
        %809 = vmatprep.subr.bf16.mxu0 0
        %810 = vmatpush1.bf16.msra.mxu0 0
        %811 = vmatprep.mubr.bf16.mxu0 0
        %812 = vmatmul.mubr.bf16.gmra.mrb[0].mxu0 %v331
        %v813 = vpop.f32.mrb[0].mxu0
        %v814 = vadd.f32 %v773, %v813
        %v815 = vpop.f32.mrb[0].mxu0
        %v816 = vpop.f32.mrb[0].mxu0
        %v817 = vadd.f32 %v776, %v816
        %v818 = vpop.f32.mrb[0].mxu0
        %819 = vdwg.mxu0
        %820 = vmatprep.subr.bf16.mxu0 0
        %821 = vmatpush1.bf16.msra.mxu0 %v732
        %822 = vmatprep.subr.bf16.mxu0 0
        %823 = vmatpush1.bf16.msra.mxu0 0
        %824 = vmatprep.subr.bf16.mxu0 0
        %825 = vmatpush1.bf16.msra.mxu0 0
        %826 = vmatprep.subr.bf16.mxu0 0
        %827 = vmatpush1.bf16.msra.mxu0 0
        %828 = vmatprep.subr.bf16.mxu0 0
        %829 = vmatpush1.bf16.msra.mxu0 0
        %830 = vmatprep.subr.bf16.mxu0 0
        %831 = vmatpush1.bf16.msra.mxu0 0
        %832 = vmatprep.subr.bf16.mxu0 0
        %833 = vmatpush1.bf16.msra.mxu0 0
        %834 = vmatprep.subr.bf16.mxu0 0
        %835 = vmatpush1.bf16.msra.mxu0 0
        %836 = vmatprep.subr.bf16.mxu0 0
        %837 = vmatpush1.bf16.msra.mxu0 0
        %838 = vmatprep.subr.bf16.mxu0 0
        %839 = vmatpush1.bf16.msra.mxu0 0
        %840 = vmatprep.subr.bf16.mxu0 0
        %841 = vmatpush1.bf16.msra.mxu0 0
        %842 = vmatprep.subr.bf16.mxu0 0
        %843 = vmatpush1.bf16.msra.mxu0 0
        %844 = vmatprep.subr.bf16.mxu0 0
        %845 = vmatpush1.bf16.msra.mxu0 0
        %846 = vmatprep.subr.bf16.mxu0 0
        %847 = vmatpush1.bf16.msra.mxu0 0
        %848 = vmatprep.subr.bf16.mxu0 0
        %849 = vmatpush1.bf16.msra.mxu0 0
        %850 = vmatprep.subr.bf16.mxu0 0
        %851 = vmatpush1.bf16.msra.mxu0 0
        %852 = vmatprep.mubr.bf16.mxu0 0
        %853 = vmatmul.mubr.bf16.gmra.mrb[0].mxu0 %v421
        %v854 = vpop.f32.mrb[0].mxu0
        %v855 = vadd.f32 0.0, %v854
        %v856 = vpop.f32.mrb[0].mxu0
        %v857 = vpop.f32.mrb[0].mxu0
        %v858 = vadd.f32 0.0, %v857
        %v859 = vpop.f32.mrb[0].mxu0
        %860 = vdwg.mxu0
        %v861 = vadd.f32 %v814, %v855
        %v862 = vadd.f32 %v817, %v858
        %v863 = vmul.f32 %v299, %v301
        %v864 = vmul.f32 %v300, %v302
        %v865 = vpack.c.bf16 %v864, %v863
        %v866 = vunpack.c.l.bf16 %v865
        %v867 = vunpack.c.h.bf16 %v865
        %v868 = vsub.f32 %v863, %v866
        %v869 = vsub.f32 %v864, %v867
        %v870 = vpack.c.bf16 %v869, %v868
        %871 = vmatprep.subr.bf16.mxu0 0
        %872 = vmatpush1.bf16.msra.mxu0 %v870
        %873 = vmatprep.subr.bf16.mxu0 0
        %874 = vmatpush1.bf16.msra.mxu0 0
        %875 = vmatprep.subr.bf16.mxu0 0
        %876 = vmatpush1.bf16.msra.mxu0 0
        %877 = vmatprep.subr.bf16.mxu0 0
        %878 = vmatpush1.bf16.msra.mxu0 0
        %879 = vmatprep.subr.bf16.mxu0 0
        %880 = vmatpush1.bf16.msra.mxu0 0
        %881 = vmatprep.subr.bf16.mxu0 0
        %882 = vmatpush1.bf16.msra.mxu0 0
        %883 = vmatprep.subr.bf16.mxu0 0
        %884 = vmatpush1.bf16.msra.mxu0 0
        %885 = vmatprep.subr.bf16.mxu0 0
        %886 = vmatpush1.bf16.msra.mxu0 0
        %887 = vmatprep.subr.bf16.mxu0 0
        %888 = vmatpush1.bf16.msra.mxu0 0
        %889 = vmatprep.subr.bf16.mxu0 0
        %890 = vmatpush1.bf16.msra.mxu0 0
        %891 = vmatprep.subr.bf16.mxu0 0
        %892 = vmatpush1.bf16.msra.mxu0 0
        %893 = vmatprep.subr.bf16.mxu0 0
        %894 = vmatpush1.bf16.msra.mxu0 0
        %895 = vmatprep.subr.bf16.mxu0 0
        %896 = vmatpush1.bf16.msra.mxu0 0
        %897 = vmatprep.subr.bf16.mxu0 0
        %898 = vmatpush1.bf16.msra.mxu0 0
        %899 = vmatprep.subr.bf16.mxu0 0
        %900 = vmatpush1.bf16.msra.mxu0 0
        %901 = vmatprep.subr.bf16.mxu0 0
        %902 = vmatpush1.bf16.msra.mxu0 0
        %903 = vmatprep.mubr.bf16.mxu0 0
        %904 = vmatmul.mubr.bf16.gmra.mrb[0].mxu0 %v331
        %v905 = vpop.f32.mrb[0].mxu0
        %v906 = vadd.f32 0.0, %v905
        %v907 = vpop.f32.mrb[0].mxu0
        %v908 = vpop.f32.mrb[0].mxu0
        %v909 = vadd.f32 0.0, %v908
        %v910 = vpop.f32.mrb[0].mxu0
        %911 = vdwg.mxu0
        %912 = vmatprep.subr.bf16.mxu0 0
        %913 = vmatpush1.bf16.msra.mxu0 %v865
        %914 = vmatprep.subr.bf16.mxu0 0
        %915 = vmatpush1.bf16.msra.mxu0 0
        %916 = vmatprep.subr.bf16.mxu0 0
        %917 = vmatpush1.bf16.msra.mxu0 0
        %918 = vmatprep.subr.bf16.mxu0 0
        %919 = vmatpush1.bf16.msra.mxu0 0
        %920 = vmatprep.subr.bf16.mxu0 0
        %921 = vmatpush1.bf16.msra.mxu0 0
        %922 = vmatprep.subr.bf16.mxu0 0
        %923 = vmatpush1.bf16.msra.mxu0 0
        %924 = vmatprep.subr.bf16.mxu0 0
        %925 = vmatpush1.bf16.msra.mxu0 0
        %926 = vmatprep.subr.bf16.mxu0 0
        %927 = vmatpush1.bf16.msra.mxu0 0
        %928 = vmatprep.subr.bf16.mxu0 0
        %929 = vmatpush1.bf16.msra.mxu0 0
        %930 = vmatprep.subr.bf16.mxu0 0
        %931 = vmatpush1.bf16.msra.mxu0 0
        %932 = vmatprep.subr.bf16.mxu0 0
        %933 = vmatpush1.bf16.msra.mxu0 0
        %934 = vmatprep.subr.bf16.mxu0 0
        %935 = vmatpush1.bf16.msra.mxu0 0
        %936 = vmatprep.subr.bf16.mxu0 0
        %937 = vmatpush1.bf16.msra.mxu0 0
        %938 = vmatprep.subr.bf16.mxu0 0
        %939 = vmatpush1.bf16.msra.mxu0 0
        %940 = vmatprep.subr.bf16.mxu0 0
        %941 = vmatpush1.bf16.msra.mxu0 0
        %942 = vmatprep.subr.bf16.mxu0 0
        %943 = vmatpush1.bf16.msra.mxu0 0
        %944 = vmatprep.mubr.bf16.mxu0 0
        %945 = vmatmul.mubr.bf16.gmra.mrb[0].mxu0 %v331
        %v946 = vpop.f32.mrb[0].mxu0
        %v947 = vadd.f32 %v906, %v946
        %v948 = vpop.f32.mrb[0].mxu0
        %v949 = vpop.f32.mrb[0].mxu0
        %v950 = vadd.f32 %v909, %v949
        %v951 = vpop.f32.mrb[0].mxu0
        %952 = vdwg.mxu0
        %953 = vmatprep.subr.bf16.mxu0 0
        %954 = vmatpush1.bf16.msra.mxu0 %v865
        %955 = vmatprep.subr.bf16.mxu0 0
        %956 = vmatpush1.bf16.msra.mxu0 0
        %957 = vmatprep.subr.bf16.mxu0 0
        %958 = vmatpush1.bf16.msra.mxu0 0
        %959 = vmatprep.subr.bf16.mxu0 0
        %960 = vmatpush1.bf16.msra.mxu0 0
        %961 = vmatprep.subr.bf16.mxu0 0
        %962 = vmatpush1.bf16.msra.mxu0 0
        %963 = vmatprep.subr.bf16.mxu0 0
        %964 = vmatpush1.bf16.msra.mxu0 0
        %965 = vmatprep.subr.bf16.mxu0 0
        %966 = vmatpush1.bf16.msra.mxu0 0
        %967 = vmatprep.subr.bf16.mxu0 0
        %968 = vmatpush1.bf16.msra.mxu0 0
        %969 = vmatprep.subr.bf16.mxu0 0
        %970 = vmatpush1.bf16.msra.mxu0 0
        %971 = vmatprep.subr.bf16.mxu0 0
        %972 = vmatpush1.bf16.msra.mxu0 0
        %973 = vmatprep.subr.bf16.mxu0 0
        %974 = vmatpush1.bf16.msra.mxu0 0
        %975 = vmatprep.subr.bf16.mxu0 0
        %976 = vmatpush1.bf16.msra.mxu0 0
        %977 = vmatprep.subr.bf16.mxu0 0
        %978 = vmatpush1.bf16.msra.mxu0 0
        %979 = vmatprep.subr.bf16.mxu0 0
        %980 = vmatpush1.bf16.msra.mxu0 0
        %981 = vmatprep.subr.bf16.mxu0 0
        %982 = vmatpush1.bf16.msra.mxu0 0
        %983 = vmatprep.subr.bf16.mxu0 0
        %984 = vmatpush1.bf16.msra.mxu0 0
        %985 = vmatprep.mubr.bf16.mxu0 0
        %986 = vmatmul.mubr.bf16.gmra.mrb[0].mxu0 %v421
        %v987 = vpop.f32.mrb[0].mxu0
        %v988 = vadd.f32 0.0, %v987
        %v989 = vpop.f32.mrb[0].mxu0
        %v990 = vpop.f32.mrb[0].mxu0
        %v991 = vadd.f32 0.0, %v990
        %v992 = vpop.f32.mrb[0].mxu0
        %993 = vdwg.mxu0
        %v994 = vadd.f32 %v947, %v988
        %v995 = vadd.f32 %v950, %v991
        %v996 = vpack.c.bf16 %v465, %v464
        %v997 = vunpack.c.l.bf16 %v996
        %v998 = vunpack.c.h.bf16 %v996
        %v999 = vsub.f32 %v464, %v997
        %v1000 = vsub.f32 %v465, %v998
        %v1001 = vpack.c.bf16 %v1000, %v999
        %v1004 = vunpack.c.l.b16 %v316
        %v1005 = vunpack.c.l.b16 %v317
        %v1006 = vpack.c.b16 %v1005, %v1004
        %v1009 = vsel %vm329, %v996, 0
        %1011 = vmatprep.subr.bf16.mxu0 0
        %1012 = vmatpush1.bf16.msra.mxu0 %v1006
        %1013 = vmatprep.subr.bf16.mxu0 0
        %1014 = vmatpush1.bf16.msra.mxu0 0
        %1015 = vmatprep.subr.bf16.mxu0 0
        %1016 = vmatpush1.bf16.msra.mxu0 0
        %1017 = vmatprep.subr.bf16.mxu0 0
        %1018 = vmatpush1.bf16.msra.mxu0 0
        %1019 = vmatprep.subr.bf16.mxu0 0
        %1020 = vmatpush1.bf16.msra.mxu0 0
        %1021 = vmatprep.subr.bf16.mxu0 0
        %1022 = vmatpush1.bf16.msra.mxu0 0
        %1023 = vmatprep.subr.bf16.mxu0 0
        %1024 = vmatpush1.bf16.msra.mxu0 0
        %1025 = vmatprep.subr.bf16.mxu0 0
        %1026 = vmatpush1.bf16.msra.mxu0 0
        %1027 = vmatprep.subr.bf16.mxu0 0
        %1028 = vmatpush1.bf16.msra.mxu0 0
        %1029 = vmatprep.subr.bf16.mxu0 0
        %1030 = vmatpush1.bf16.msra.mxu0 0
        %1031 = vmatprep.subr.bf16.mxu0 0
        %1032 = vmatpush1.bf16.msra.mxu0 0
        %1033 = vmatprep.subr.bf16.mxu0 0
        %1034 = vmatpush1.bf16.msra.mxu0 0
        %1035 = vmatprep.subr.bf16.mxu0 0
        %1036 = vmatpush1.bf16.msra.mxu0 0
        %1037 = vmatprep.subr.bf16.mxu0 0
        %1038 = vmatpush1.bf16.msra.mxu0 0
        %1039 = vmatprep.subr.bf16.mxu0 0
        %1040 = vmatpush1.bf16.msra.mxu0 0
        %1041 = vmatprep.subr.bf16.mxu0 0
        %1042 = vmatpush1.bf16.msra.mxu0 0
        %1043 = vmatprep.mubr.bf16.mxu0 0
        %1044 = vmatmul.mubr.bf16.gmra.mrb[0].mxu0 %v1009
        %v1045 = vpop.f32.mrb[0].mxu0
        %v1046 = vadd.f32 0.0, %v1045
        %v1047 = vpop.f32.mrb[0].mxu0
        %v1048 = vpop.f32.mrb[0].mxu0
        %v1049 = vadd.f32 0.0, %v1048
        %v1050 = vpop.f32.mrb[0].mxu0
        %1051 = vdwg.mxu0
        %v1054 = vunpack.c.l.b16 %v313
        %v1055 = vunpack.c.l.b16 %v314
        %v1056 = vpack.c.b16 %v1055, %v1054
        %1058 = vmatprep.subr.bf16.mxu0 0
        %1059 = vmatpush1.bf16.msra.mxu0 %v1056
        %1060 = vmatprep.subr.bf16.mxu0 0
        %1061 = vmatpush1.bf16.msra.mxu0 0
        %1062 = vmatprep.subr.bf16.mxu0 0
        %1063 = vmatpush1.bf16.msra.mxu0 0
        %1064 = vmatprep.subr.bf16.mxu0 0
        %1065 = vmatpush1.bf16.msra.mxu0 0
        %1066 = vmatprep.subr.bf16.mxu0 0
        %1067 = vmatpush1.bf16.msra.mxu0 0
        %1068 = vmatprep.subr.bf16.mxu0 0
        %1069 = vmatpush1.bf16.msra.mxu0 0
        %1070 = vmatprep.subr.bf16.mxu0 0
        %1071 = vmatpush1.bf16.msra.mxu0 0
        %1072 = vmatprep.subr.bf16.mxu0 0
        %1073 = vmatpush1.bf16.msra.mxu0 0
        %1074 = vmatprep.subr.bf16.mxu0 0
        %1075 = vmatpush1.bf16.msra.mxu0 0
        %1076 = vmatprep.subr.bf16.mxu0 0
        %1077 = vmatpush1.bf16.msra.mxu0 0
        %1078 = vmatprep.subr.bf16.mxu0 0
        %1079 = vmatpush1.bf16.msra.mxu0 0
        %1080 = vmatprep.subr.bf16.mxu0 0
        %1081 = vmatpush1.bf16.msra.mxu0 0
        %1082 = vmatprep.subr.bf16.mxu0 0
        %1083 = vmatpush1.bf16.msra.mxu0 0
        %1084 = vmatprep.subr.bf16.mxu0 0
        %1085 = vmatpush1.bf16.msra.mxu0 0
        %1086 = vmatprep.subr.bf16.mxu0 0
        %1087 = vmatpush1.bf16.msra.mxu0 0
        %1088 = vmatprep.subr.bf16.mxu0 0
        %1089 = vmatpush1.bf16.msra.mxu0 0
        %1090 = vmatprep.mubr.bf16.mxu0 0
        %1091 = vmatmul.mubr.bf16.gmra.mrb[0].mxu0 %v1009
        %v1092 = vpop.f32.mrb[0].mxu0
        %v1093 = vadd.f32 %v1046, %v1092
        %v1094 = vpop.f32.mrb[0].mxu0
        %v1095 = vpop.f32.mrb[0].mxu0
        %v1096 = vadd.f32 %v1049, %v1095
        %v1097 = vpop.f32.mrb[0].mxu0
        %1098 = vdwg.mxu0
        %v1100 = vsel %vm329, %v1001, 0
        %1102 = vmatprep.subr.bf16.mxu0 0
        %1103 = vmatpush1.bf16.msra.mxu0 %v1056
        %1104 = vmatprep.subr.bf16.mxu0 0
        %1105 = vmatpush1.bf16.msra.mxu0 0
        %1106 = vmatprep.subr.bf16.mxu0 0
        %1107 = vmatpush1.bf16.msra.mxu0 0
        %1108 = vmatprep.subr.bf16.mxu0 0
        %1109 = vmatpush1.bf16.msra.mxu0 0
        %1110 = vmatprep.subr.bf16.mxu0 0
        %1111 = vmatpush1.bf16.msra.mxu0 0
        %1112 = vmatprep.subr.bf16.mxu0 0
        %1113 = vmatpush1.bf16.msra.mxu0 0
        %1114 = vmatprep.subr.bf16.mxu0 0
        %1115 = vmatpush1.bf16.msra.mxu0 0
        %1116 = vmatprep.subr.bf16.mxu0 0
        %1117 = vmatpush1.bf16.msra.mxu0 0
        %1118 = vmatprep.subr.bf16.mxu0 0
        %1119 = vmatpush1.bf16.msra.mxu0 0
        %1120 = vmatprep.subr.bf16.mxu0 0
        %1121 = vmatpush1.bf16.msra.mxu0 0
        %1122 = vmatprep.subr.bf16.mxu0 0
        %1123 = vmatpush1.bf16.msra.mxu0 0
        %1124 = vmatprep.subr.bf16.mxu0 0
        %1125 = vmatpush1.bf16.msra.mxu0 0
        %1126 = vmatprep.subr.bf16.mxu0 0
        %1127 = vmatpush1.bf16.msra.mxu0 0
        %1128 = vmatprep.subr.bf16.mxu0 0
        %1129 = vmatpush1.bf16.msra.mxu0 0
        %1130 = vmatprep.subr.bf16.mxu0 0
        %1131 = vmatpush1.bf16.msra.mxu0 0
        %1132 = vmatprep.subr.bf16.mxu0 0
        %1133 = vmatpush1.bf16.msra.mxu0 0
        %1134 = vmatprep.mubr.bf16.mxu0 0
        %1135 = vmatmul.mubr.bf16.gmra.mrb[0].mxu0 %v1100
        %v1136 = vpop.f32.mrb[0].mxu0
        %v1137 = vadd.f32 0.0, %v1136
        %v1138 = vpop.f32.mrb[0].mxu0
        %v1139 = vpop.f32.mrb[0].mxu0
        %v1140 = vadd.f32 0.0, %v1139
        %v1141 = vpop.f32.mrb[0].mxu0
        %1142 = vdwg.mxu0
        %v1143 = vadd.f32 %v1093, %v1137
        %v1144 = vadd.f32 %v1096, %v1140
        %v1145 = vpack.c.bf16 %v596, %v595
        %v1146 = vunpack.c.l.bf16 %v1145
        %v1147 = vunpack.c.h.bf16 %v1145
        %v1148 = vsub.f32 %v595, %v1146
        %v1149 = vsub.f32 %v596, %v1147
        %v1150 = vpack.c.bf16 %v1149, %v1148
        %v1152 = vsel %vm329, %v1145, 0
        %1154 = vmatprep.subr.bf16.mxu0 0
        %1155 = vmatpush1.bf16.msra.mxu0 %v1006
        %1156 = vmatprep.subr.bf16.mxu0 0
        %1157 = vmatpush1.bf16.msra.mxu0 0
        %1158 = vmatprep.subr.bf16.mxu0 0
        %1159 = vmatpush1.bf16.msra.mxu0 0
        %1160 = vmatprep.subr.bf16.mxu0 0
        %1161 = vmatpush1.bf16.msra.mxu0 0
        %1162 = vmatprep.subr.bf16.mxu0 0
        %1163 = vmatpush1.bf16.msra.mxu0 0
        %1164 = vmatprep.subr.bf16.mxu0 0
        %1165 = vmatpush1.bf16.msra.mxu0 0
        %1166 = vmatprep.subr.bf16.mxu0 0
        %1167 = vmatpush1.bf16.msra.mxu0 0
        %1168 = vmatprep.subr.bf16.mxu0 0
        %1169 = vmatpush1.bf16.msra.mxu0 0
        %1170 = vmatprep.subr.bf16.mxu0 0
        %1171 = vmatpush1.bf16.msra.mxu0 0
        %1172 = vmatprep.subr.bf16.mxu0 0
        %1173 = vmatpush1.bf16.msra.mxu0 0
        %1174 = vmatprep.subr.bf16.mxu0 0
        %1175 = vmatpush1.bf16.msra.mxu0 0
        %1176 = vmatprep.subr.bf16.mxu0 0
        %1177 = vmatpush1.bf16.msra.mxu0 0
        %1178 = vmatprep.subr.bf16.mxu0 0
        %1179 = vmatpush1.bf16.msra.mxu0 0
        %1180 = vmatprep.subr.bf16.mxu0 0
        %1181 = vmatpush1.bf16.msra.mxu0 0
        %1182 = vmatprep.subr.bf16.mxu0 0
        %1183 = vmatpush1.bf16.msra.mxu0 0
        %1184 = vmatprep.subr.bf16.mxu0 0
        %1185 = vmatpush1.bf16.msra.mxu0 0
        %1186 = vmatprep.mubr.bf16.mxu0 0
        %1187 = vmatmul.mubr.bf16.gmra.mrb[0].mxu0 %v1152
        %v1188 = vpop.f32.mrb[0].mxu0
        %v1189 = vadd.f32 0.0, %v1188
        %v1190 = vpop.f32.mrb[0].mxu0
        %v1191 = vpop.f32.mrb[0].mxu0
        %v1192 = vadd.f32 0.0, %v1191
        %v1193 = vpop.f32.mrb[0].mxu0
        %1194 = vdwg.mxu0
        %1195 = vmatprep.subr.bf16.mxu0 0
        %1196 = vmatpush1.bf16.msra.mxu0 %v1056
        %1197 = vmatprep.subr.bf16.mxu0 0
        %1198 = vmatpush1.bf16.msra.mxu0 0
        %1199 = vmatprep.subr.bf16.mxu0 0
        %1200 = vmatpush1.bf16.msra.mxu0 0
        %1201 = vmatprep.subr.bf16.mxu0 0
        %1202 = vmatpush1.bf16.msra.mxu0 0
        %1203 = vmatprep.subr.bf16.mxu0 0
        %1204 = vmatpush1.bf16.msra.mxu0 0
        %1205 = vmatprep.subr.bf16.mxu0 0
        %1206 = vmatpush1.bf16.msra.mxu0 0
        %1207 = vmatprep.subr.bf16.mxu0 0
        %1208 = vmatpush1.bf16.msra.mxu0 0
        %1209 = vmatprep.subr.bf16.mxu0 0
        %1210 = vmatpush1.bf16.msra.mxu0 0
        %1211 = vmatprep.subr.bf16.mxu0 0
        %1212 = vmatpush1.bf16.msra.mxu0 0
        %1213 = vmatprep.subr.bf16.mxu0 0
        %1214 = vmatpush1.bf16.msra.mxu0 0
        %1215 = vmatprep.subr.bf16.mxu0 0
        %1216 = vmatpush1.bf16.msra.mxu0 0
        %1217 = vmatprep.subr.bf16.mxu0 0
        %1218 = vmatpush1.bf16.msra.mxu0 0
        %1219 = vmatprep.subr.bf16.mxu0 0
        %1220 = vmatpush1.bf16.msra.mxu0 0
        %1221 = vmatprep.subr.bf16.mxu0 0
        %1222 = vmatpush1.bf16.msra.mxu0 0
        %1223 = vmatprep.subr.bf16.mxu0 0
        %1224 = vmatpush1.bf16.msra.mxu0 0
        %1225 = vmatprep.subr.bf16.mxu0 0
        %1226 = vmatpush1.bf16.msra.mxu0 0
        %1227 = vmatprep.mubr.bf16.mxu0 0
        %1228 = vmatmul.mubr.bf16.gmra.mrb[0].mxu0 %v1152
        %v1229 = vpop.f32.mrb[0].mxu0
        %v1230 = vadd.f32 %v1189, %v1229
        %v1231 = vpop.f32.mrb[0].mxu0
        %v1232 = vpop.f32.mrb[0].mxu0
        %v1233 = vadd.f32 %v1192, %v1232
        %v1234 = vpop.f32.mrb[0].mxu0
        %1235 = vdwg.mxu0
        %v1237 = vsel %vm329, %v1150, 0
        %1239 = vmatprep.subr.bf16.mxu0 0
        %1240 = vmatpush1.bf16.msra.mxu0 %v1056
        %1241 = vmatprep.subr.bf16.mxu0 0
        %1242 = vmatpush1.bf16.msra.mxu0 0
        %1243 = vmatprep.subr.bf16.mxu0 0
        %1244 = vmatpush1.bf16.msra.mxu0 0
        %1245 = vmatprep.subr.bf16.mxu0 0
        %1246 = vmatpush1.bf16.msra.mxu0 0
        %1247 = vmatprep.subr.bf16.mxu0 0
        %1248 = vmatpush1.bf16.msra.mxu0 0
        %1249 = vmatprep.subr.bf16.mxu0 0
        %1250 = vmatpush1.bf16.msra.mxu0 0
        %1251 = vmatprep.subr.bf16.mxu0 0
        %1252 = vmatpush1.bf16.msra.mxu0 0
        %1253 = vmatprep.subr.bf16.mxu0 0
        %1254 = vmatpush1.bf16.msra.mxu0 0
        %1255 = vmatprep.subr.bf16.mxu0 0
        %1256 = vmatpush1.bf16.msra.mxu0 0
        %1257 = vmatprep.subr.bf16.mxu0 0
        %1258 = vmatpush1.bf16.msra.mxu0 0
        %1259 = vmatprep.subr.bf16.mxu0 0
        %1260 = vmatpush1.bf16.msra.mxu0 0
        %1261 = vmatprep.subr.bf16.mxu0 0
        %1262 = vmatpush1.bf16.msra.mxu0 0
        %1263 = vmatprep.subr.bf16.mxu0 0
        %1264 = vmatpush1.bf16.msra.mxu0 0
        %1265 = vmatprep.subr.bf16.mxu0 0
        %1266 = vmatpush1.bf16.msra.mxu0 0
        %1267 = vmatprep.subr.bf16.mxu0 0
        %1268 = vmatpush1.bf16.msra.mxu0 0
        %1269 = vmatprep.subr.bf16.mxu0 0
        %1270 = vmatpush1.bf16.msra.mxu0 0
        %1271 = vmatprep.mubr.bf16.mxu0 0
        %1272 = vmatmul.mubr.bf16.gmra.mrb[0].mxu0 %v1237
        %v1273 = vpop.f32.mrb[0].mxu0
        %v1274 = vadd.f32 0.0, %v1273
        %v1275 = vpop.f32.mrb[0].mxu0
        %v1276 = vpop.f32.mrb[0].mxu0
        %v1277 = vadd.f32 0.0, %v1276
        %v1278 = vpop.f32.mrb[0].mxu0
        %1279 = vdwg.mxu0
        %v1280 = vadd.f32 %v1230, %v1274
        %v1281 = vadd.f32 %v1233, %v1277
        %v1282 = vmul.f32 %v1143, %v1143
        %v1283 = vmul.f32 %v1144, %v1144
        %v1284 = vmul.f32 %v1280, %v1280
        %v1285 = vmul.f32 %v1281, %v1281
        %v1286 = vmul.f32 %v1143, %v1280
        %v1287 = vmul.f32 %v1144, %v1281
        %v1288 = vpack.c.bf16 %v729, %v728
        %v1289 = vunpack.c.l.bf16 %v1288
        %v1290 = vunpack.c.h.bf16 %v1288
        %v1291 = vsub.f32 %v728, %v1289
        %v1292 = vsub.f32 %v729, %v1290
        %v1293 = vpack.c.bf16 %v1292, %v1291
        %v1295 = vsel %vm329, %v1288, 0
        %1297 = vmatprep.subr.bf16.mxu0 0
        %1298 = vmatpush1.bf16.msra.mxu0 %v1006
        %1299 = vmatprep.subr.bf16.mxu0 0
        %1300 = vmatpush1.bf16.msra.mxu0 0
        %1301 = vmatprep.subr.bf16.mxu0 0
        %1302 = vmatpush1.bf16.msra.mxu0 0
        %1303 = vmatprep.subr.bf16.mxu0 0
        %1304 = vmatpush1.bf16.msra.mxu0 0
        %1305 = vmatprep.subr.bf16.mxu0 0
        %1306 = vmatpush1.bf16.msra.mxu0 0
        %1307 = vmatprep.subr.bf16.mxu0 0
        %1308 = vmatpush1.bf16.msra.mxu0 0
        %1309 = vmatprep.subr.bf16.mxu0 0
        %1310 = vmatpush1.bf16.msra.mxu0 0
        %1311 = vmatprep.subr.bf16.mxu0 0
        %1312 = vmatpush1.bf16.msra.mxu0 0
        %1313 = vmatprep.subr.bf16.mxu0 0
        %1314 = vmatpush1.bf16.msra.mxu0 0
        %1315 = vmatprep.subr.bf16.mxu0 0
        %1316 = vmatpush1.bf16.msra.mxu0 0
        %1317 = vmatprep.subr.bf16.mxu0 0
        %1318 = vmatpush1.bf16.msra.mxu0 0
        %1319 = vmatprep.subr.bf16.mxu0 0
        %1320 = vmatpush1.bf16.msra.mxu0 0
        %1321 = vmatprep.subr.bf16.mxu0 0
        %1322 = vmatpush1.bf16.msra.mxu0 0
        %1323 = vmatprep.subr.bf16.mxu0 0
        %1324 = vmatpush1.bf16.msra.mxu0 0
        %1325 = vmatprep.subr.bf16.mxu0 0
        %1326 = vmatpush1.bf16.msra.mxu0 0
        %1327 = vmatprep.subr.bf16.mxu0 0
        %1328 = vmatpush1.bf16.msra.mxu0 0
        %1329 = vmatprep.mubr.bf16.mxu0 0
        %1330 = vmatmul.mubr.bf16.gmra.mrb[0].mxu0 %v1295
        %v1331 = vpop.f32.mrb[0].mxu0
        %v1332 = vadd.f32 0.0, %v1331
        %v1333 = vpop.f32.mrb[0].mxu0
        %v1334 = vpop.f32.mrb[0].mxu0
        %v1335 = vadd.f32 0.0, %v1334
        %v1336 = vpop.f32.mrb[0].mxu0
        %1337 = vdwg.mxu0
        %1338 = vmatprep.subr.bf16.mxu0 0
        %1339 = vmatpush1.bf16.msra.mxu0 %v1056
        %1340 = vmatprep.subr.bf16.mxu0 0
        %1341 = vmatpush1.bf16.msra.mxu0 0
        %1342 = vmatprep.subr.bf16.mxu0 0
        %1343 = vmatpush1.bf16.msra.mxu0 0
        %1344 = vmatprep.subr.bf16.mxu0 0
        %1345 = vmatpush1.bf16.msra.mxu0 0
        %1346 = vmatprep.subr.bf16.mxu0 0
        %1347 = vmatpush1.bf16.msra.mxu0 0
        %1348 = vmatprep.subr.bf16.mxu0 0
        %1349 = vmatpush1.bf16.msra.mxu0 0
        %1350 = vmatprep.subr.bf16.mxu0 0
        %1351 = vmatpush1.bf16.msra.mxu0 0
        %1352 = vmatprep.subr.bf16.mxu0 0
        %1353 = vmatpush1.bf16.msra.mxu0 0
        %1354 = vmatprep.subr.bf16.mxu0 0
        %1355 = vmatpush1.bf16.msra.mxu0 0
        %1356 = vmatprep.subr.bf16.mxu0 0
        %1357 = vmatpush1.bf16.msra.mxu0 0
        %1358 = vmatprep.subr.bf16.mxu0 0
        %1359 = vmatpush1.bf16.msra.mxu0 0
        %1360 = vmatprep.subr.bf16.mxu0 0
        %1361 = vmatpush1.bf16.msra.mxu0 0
        %1362 = vmatprep.subr.bf16.mxu0 0
        %1363 = vmatpush1.bf16.msra.mxu0 0
        %1364 = vmatprep.subr.bf16.mxu0 0
        %1365 = vmatpush1.bf16.msra.mxu0 0
        %1366 = vmatprep.subr.bf16.mxu0 0
        %1367 = vmatpush1.bf16.msra.mxu0 0
        %1368 = vmatprep.subr.bf16.mxu0 0
        %1369 = vmatpush1.bf16.msra.mxu0 0
        %1370 = vmatprep.mubr.bf16.mxu0 0
        %1371 = vmatmul.mubr.bf16.gmra.mrb[0].mxu0 %v1295
        %v1372 = vpop.f32.mrb[0].mxu0
        %v1373 = vadd.f32 %v1332, %v1372
        %v1374 = vpop.f32.mrb[0].mxu0
        %v1375 = vpop.f32.mrb[0].mxu0
        %v1376 = vadd.f32 %v1335, %v1375
        %v1377 = vpop.f32.mrb[0].mxu0
        %1378 = vdwg.mxu0
        %v1380 = vsel %vm329, %v1293, 0
        %1382 = vmatprep.subr.bf16.mxu0 0
        %1383 = vmatpush1.bf16.msra.mxu0 %v1056
        %1384 = vmatprep.subr.bf16.mxu0 0
        %1385 = vmatpush1.bf16.msra.mxu0 0
        %1386 = vmatprep.subr.bf16.mxu0 0
        %1387 = vmatpush1.bf16.msra.mxu0 0
        %1388 = vmatprep.subr.bf16.mxu0 0
        %1389 = vmatpush1.bf16.msra.mxu0 0
        %1390 = vmatprep.subr.bf16.mxu0 0
        %1391 = vmatpush1.bf16.msra.mxu0 0
        %1392 = vmatprep.subr.bf16.mxu0 0
        %1393 = vmatpush1.bf16.msra.mxu0 0
        %1394 = vmatprep.subr.bf16.mxu0 0
        %1395 = vmatpush1.bf16.msra.mxu0 0
        %1396 = vmatprep.subr.bf16.mxu0 0
        %1397 = vmatpush1.bf16.msra.mxu0 0
        %1398 = vmatprep.subr.bf16.mxu0 0
        %1399 = vmatpush1.bf16.msra.mxu0 0
        %1400 = vmatprep.subr.bf16.mxu0 0
        %1401 = vmatpush1.bf16.msra.mxu0 0
        %1402 = vmatprep.subr.bf16.mxu0 0
        %1403 = vmatpush1.bf16.msra.mxu0 0
        %1404 = vmatprep.subr.bf16.mxu0 0
        %1405 = vmatpush1.bf16.msra.mxu0 0
        %1406 = vmatprep.subr.bf16.mxu0 0
        %1407 = vmatpush1.bf16.msra.mxu0 0
        %1408 = vmatprep.subr.bf16.mxu0 0
        %1409 = vmatpush1.bf16.msra.mxu0 0
        %1410 = vmatprep.subr.bf16.mxu0 0
        %1411 = vmatpush1.bf16.msra.mxu0 0
        %1412 = vmatprep.subr.bf16.mxu0 0
        %1413 = vmatpush1.bf16.msra.mxu0 0
        %1414 = vmatprep.mubr.bf16.mxu0 0
        %1415 = vmatmul.mubr.bf16.gmra.mrb[0].mxu0 %v1380
        %v1416 = vpop.f32.mrb[0].mxu0
        %v1417 = vadd.f32 0.0, %v1416
        %v1418 = vpop.f32.mrb[0].mxu0
        %v1419 = vpop.f32.mrb[0].mxu0
        %v1420 = vadd.f32 0.0, %v1419
        %v1421 = vpop.f32.mrb[0].mxu0
        %1422 = vdwg.mxu0
        %v1423 = vadd.f32 %v1373, %v1417
        %v1424 = vadd.f32 %v1376, %v1420
        %v1425 = vsub.f32 %v1423, %v1282
        %v1426 = vsub.f32 %v1424, %v1283
        %v1427 = vpack.c.bf16 %v862, %v861
        %v1428 = vunpack.c.l.bf16 %v1427
        %v1429 = vunpack.c.h.bf16 %v1427
        %v1430 = vsub.f32 %v861, %v1428
        %v1431 = vsub.f32 %v862, %v1429
        %v1432 = vpack.c.bf16 %v1431, %v1430
        %v1434 = vsel %vm329, %v1427, 0
        %1436 = vmatprep.subr.bf16.mxu0 0
        %1437 = vmatpush1.bf16.msra.mxu0 %v1006
        %1438 = vmatprep.subr.bf16.mxu0 0
        %1439 = vmatpush1.bf16.msra.mxu0 0
        %1440 = vmatprep.subr.bf16.mxu0 0
        %1441 = vmatpush1.bf16.msra.mxu0 0
        %1442 = vmatprep.subr.bf16.mxu0 0
        %1443 = vmatpush1.bf16.msra.mxu0 0
        %1444 = vmatprep.subr.bf16.mxu0 0
        %1445 = vmatpush1.bf16.msra.mxu0 0
        %1446 = vmatprep.subr.bf16.mxu0 0
        %1447 = vmatpush1.bf16.msra.mxu0 0
        %1448 = vmatprep.subr.bf16.mxu0 0
        %1449 = vmatpush1.bf16.msra.mxu0 0
        %1450 = vmatprep.subr.bf16.mxu0 0
        %1451 = vmatpush1.bf16.msra.mxu0 0
        %1452 = vmatprep.subr.bf16.mxu0 0
        %1453 = vmatpush1.bf16.msra.mxu0 0
        %1454 = vmatprep.subr.bf16.mxu0 0
        %1455 = vmatpush1.bf16.msra.mxu0 0
        %1456 = vmatprep.subr.bf16.mxu0 0
        %1457 = vmatpush1.bf16.msra.mxu0 0
        %1458 = vmatprep.subr.bf16.mxu0 0
        %1459 = vmatpush1.bf16.msra.mxu0 0
        %1460 = vmatprep.subr.bf16.mxu0 0
        %1461 = vmatpush1.bf16.msra.mxu0 0
        %1462 = vmatprep.subr.bf16.mxu0 0
        %1463 = vmatpush1.bf16.msra.mxu0 0
        %1464 = vmatprep.subr.bf16.mxu0 0
        %1465 = vmatpush1.bf16.msra.mxu0 0
        %1466 = vmatprep.subr.bf16.mxu0 0
        %1467 = vmatpush1.bf16.msra.mxu0 0
        %1468 = vmatprep.mubr.bf16.mxu0 0
        %1469 = vmatmul.mubr.bf16.gmra.mrb[0].mxu0 %v1434
        %v1470 = vpop.f32.mrb[0].mxu0
        %v1471 = vadd.f32 0.0, %v1470
        %v1472 = vpop.f32.mrb[0].mxu0
        %v1473 = vpop.f32.mrb[0].mxu0
        %v1474 = vadd.f32 0.0, %v1473
        %v1475 = vpop.f32.mrb[0].mxu0
        %1476 = vdwg.mxu0
        %1477 = vmatprep.subr.bf16.mxu0 0
        %1478 = vmatpush1.bf16.msra.mxu0 %v1056
        %1479 = vmatprep.subr.bf16.mxu0 0
        %1480 = vmatpush1.bf16.msra.mxu0 0
        %1481 = vmatprep.subr.bf16.mxu0 0
        %1482 = vmatpush1.bf16.msra.mxu0 0
        %1483 = vmatprep.subr.bf16.mxu0 0
        %1484 = vmatpush1.bf16.msra.mxu0 0
        %1485 = vmatprep.subr.bf16.mxu0 0
        %1486 = vmatpush1.bf16.msra.mxu0 0
        %1487 = vmatprep.subr.bf16.mxu0 0
        %1488 = vmatpush1.bf16.msra.mxu0 0
        %1489 = vmatprep.subr.bf16.mxu0 0
        %1490 = vmatpush1.bf16.msra.mxu0 0
        %1491 = vmatprep.subr.bf16.mxu0 0
        %1492 = vmatpush1.bf16.msra.mxu0 0
        %1493 = vmatprep.subr.bf16.mxu0 0
        %1494 = vmatpush1.bf16.msra.mxu0 0
        %1495 = vmatprep.subr.bf16.mxu0 0
        %1496 = vmatpush1.bf16.msra.mxu0 0
        %1497 = vmatprep.subr.bf16.mxu0 0
        %1498 = vmatpush1.bf16.msra.mxu0 0
        %1499 = vmatprep.subr.bf16.mxu0 0
        %1500 = vmatpush1.bf16.msra.mxu0 0
        %1501 = vmatprep.subr.bf16.mxu0 0
        %1502 = vmatpush1.bf16.msra.mxu0 0
        %1503 = vmatprep.subr.bf16.mxu0 0
        %1504 = vmatpush1.bf16.msra.mxu0 0
        %1505 = vmatprep.subr.bf16.mxu0 0
        %1506 = vmatpush1.bf16.msra.mxu0 0
        %1507 = vmatprep.subr.bf16.mxu0 0
        %1508 = vmatpush1.bf16.msra.mxu0 0
        %1509 = vmatprep.mubr.bf16.mxu0 0
        %1510 = vmatmul.mubr.bf16.gmra.mrb[0].mxu0 %v1434
        %v1511 = vpop.f32.mrb[0].mxu0
        %v1512 = vadd.f32 %v1471, %v1511
        %v1513 = vpop.f32.mrb[0].mxu0
        %v1514 = vpop.f32.mrb[0].mxu0
        %v1515 = vadd.f32 %v1474, %v1514
        %v1516 = vpop.f32.mrb[0].mxu0
        %1517 = vdwg.mxu0
        %v1519 = vsel %vm329, %v1432, 0
        %1521 = vmatprep.subr.bf16.mxu0 0
        %1522 = vmatpush1.bf16.msra.mxu0 %v1056
        %1523 = vmatprep.subr.bf16.mxu0 0
        %1524 = vmatpush1.bf16.msra.mxu0 0
        %1525 = vmatprep.subr.bf16.mxu0 0
        %1526 = vmatpush1.bf16.msra.mxu0 0
        %1527 = vmatprep.subr.bf16.mxu0 0
        %1528 = vmatpush1.bf16.msra.mxu0 0
        %1529 = vmatprep.subr.bf16.mxu0 0
        %1530 = vmatpush1.bf16.msra.mxu0 0
        %1531 = vmatprep.subr.bf16.mxu0 0
        %1532 = vmatpush1.bf16.msra.mxu0 0
        %1533 = vmatprep.subr.bf16.mxu0 0
        %1534 = vmatpush1.bf16.msra.mxu0 0
        %1535 = vmatprep.subr.bf16.mxu0 0
        %1536 = vmatpush1.bf16.msra.mxu0 0
        %1537 = vmatprep.subr.bf16.mxu0 0
        %1538 = vmatpush1.bf16.msra.mxu0 0
        %1539 = vmatprep.subr.bf16.mxu0 0
        %1540 = vmatpush1.bf16.msra.mxu0 0
        %1541 = vmatprep.subr.bf16.mxu0 0
        %1542 = vmatpush1.bf16.msra.mxu0 0
        %1543 = vmatprep.subr.bf16.mxu0 0
        %1544 = vmatpush1.bf16.msra.mxu0 0
        %1545 = vmatprep.subr.bf16.mxu0 0
        %1546 = vmatpush1.bf16.msra.mxu0 0
        %1547 = vmatprep.subr.bf16.mxu0 0
        %1548 = vmatpush1.bf16.msra.mxu0 0
        %1549 = vmatprep.subr.bf16.mxu0 0
        %1550 = vmatpush1.bf16.msra.mxu0 0
        %1551 = vmatprep.subr.bf16.mxu0 0
        %1552 = vmatpush1.bf16.msra.mxu0 0
        %1553 = vmatprep.mubr.bf16.mxu0 0
        %1554 = vmatmul.mubr.bf16.gmra.mrb[0].mxu0 %v1519
        %v1555 = vpop.f32.mrb[0].mxu0
        %v1556 = vadd.f32 0.0, %v1555
        %v1557 = vpop.f32.mrb[0].mxu0
        %v1558 = vpop.f32.mrb[0].mxu0
        %v1559 = vadd.f32 0.0, %v1558
        %v1560 = vpop.f32.mrb[0].mxu0
        %1561 = vdwg.mxu0
        %v1562 = vadd.f32 %v1512, %v1556
        %v1563 = vadd.f32 %v1515, %v1559
        %v1564 = vsub.f32 %v1562, %v1284
        %v1565 = vsub.f32 %v1563, %v1285
        %v1566 = vpack.c.bf16 %v995, %v994
        %v1567 = vunpack.c.l.bf16 %v1566
        %v1568 = vunpack.c.h.bf16 %v1566
        %v1569 = vsub.f32 %v994, %v1567
        %v1570 = vsub.f32 %v995, %v1568
        %v1571 = vpack.c.bf16 %v1570, %v1569
        %v1573 = vsel %vm329, %v1566, 0
        %1575 = vmatprep.subr.bf16.mxu0 0
        %1576 = vmatpush1.bf16.msra.mxu0 %v1006
        %1577 = vmatprep.subr.bf16.mxu0 0
        %1578 = vmatpush1.bf16.msra.mxu0 0
        %1579 = vmatprep.subr.bf16.mxu0 0
        %1580 = vmatpush1.bf16.msra.mxu0 0
        %1581 = vmatprep.subr.bf16.mxu0 0
        %1582 = vmatpush1.bf16.msra.mxu0 0
        %1583 = vmatprep.subr.bf16.mxu0 0
        %1584 = vmatpush1.bf16.msra.mxu0 0
        %1585 = vmatprep.subr.bf16.mxu0 0
        %1586 = vmatpush1.bf16.msra.mxu0 0
        %1587 = vmatprep.subr.bf16.mxu0 0
        %1588 = vmatpush1.bf16.msra.mxu0 0
        %1589 = vmatprep.subr.bf16.mxu0 0
        %1590 = vmatpush1.bf16.msra.mxu0 0
        %1591 = vmatprep.subr.bf16.mxu0 0
        %1592 = vmatpush1.bf16.msra.mxu0 0
        %1593 = vmatprep.subr.bf16.mxu0 0
        %1594 = vmatpush1.bf16.msra.mxu0 0
        %1595 = vmatprep.subr.bf16.mxu0 0
        %1596 = vmatpush1.bf16.msra.mxu0 0
        %1597 = vmatprep.subr.bf16.mxu0 0
        %1598 = vmatpush1.bf16.msra.mxu0 0
        %1599 = vmatprep.subr.bf16.mxu0 0
        %1600 = vmatpush1.bf16.msra.mxu0 0
        %1601 = vmatprep.subr.bf16.mxu0 0
        %1602 = vmatpush1.bf16.msra.mxu0 0
        %1603 = vmatprep.subr.bf16.mxu0 0
        %1604 = vmatpush1.bf16.msra.mxu0 0
        %1605 = vmatprep.subr.bf16.mxu0 0
        %1606 = vmatpush1.bf16.msra.mxu0 0
        %1607 = vmatprep.mubr.bf16.mxu0 0
        %1608 = vmatmul.mubr.bf16.gmra.mrb[0].mxu0 %v1573
        %v1609 = vpop.f32.mrb[0].mxu0
        %v1610 = vadd.f32 0.0, %v1609
        %v1611 = vpop.f32.mrb[0].mxu0
        %v1612 = vpop.f32.mrb[0].mxu0
        %v1613 = vadd.f32 0.0, %v1612
        %v1614 = vpop.f32.mrb[0].mxu0
        %1615 = vdwg.mxu0
        %1616 = vmatprep.subr.bf16.mxu0 0
        %1617 = vmatpush1.bf16.msra.mxu0 %v1056
        %1618 = vmatprep.subr.bf16.mxu0 0
        %1619 = vmatpush1.bf16.msra.mxu0 0
        %1620 = vmatprep.subr.bf16.mxu0 0
        %1621 = vmatpush1.bf16.msra.mxu0 0
        %1622 = vmatprep.subr.bf16.mxu0 0
        %1623 = vmatpush1.bf16.msra.mxu0 0
        %1624 = vmatprep.subr.bf16.mxu0 0
        %1625 = vmatpush1.bf16.msra.mxu0 0
        %1626 = vmatprep.subr.bf16.mxu0 0
        %1627 = vmatpush1.bf16.msra.mxu0 0
        %1628 = vmatprep.subr.bf16.mxu0 0
        %1629 = vmatpush1.bf16.msra.mxu0 0
        %1630 = vmatprep.subr.bf16.mxu0 0
        %1631 = vmatpush1.bf16.msra.mxu0 0
        %1632 = vmatprep.subr.bf16.mxu0 0
        %1633 = vmatpush1.bf16.msra.mxu0 0
        %1634 = vmatprep.subr.bf16.mxu0 0
        %1635 = vmatpush1.bf16.msra.mxu0 0
        %1636 = vmatprep.subr.bf16.mxu0 0
        %1637 = vmatpush1.bf16.msra.mxu0 0
        %1638 = vmatprep.subr.bf16.mxu0 0
        %1639 = vmatpush1.bf16.msra.mxu0 0
        %1640 = vmatprep.subr.bf16.mxu0 0
        %1641 = vmatpush1.bf16.msra.mxu0 0
        %1642 = vmatprep.subr.bf16.mxu0 0
        %1643 = vmatpush1.bf16.msra.mxu0 0
        %1644 = vmatprep.subr.bf16.mxu0 0
        %1645 = vmatpush1.bf16.msra.mxu0 0
        %1646 = vmatprep.subr.bf16.mxu0 0
        %1647 = vmatpush1.bf16.msra.mxu0 0
        %1648 = vmatprep.mubr.bf16.mxu0 0
        %1649 = vmatmul.mubr.bf16.gmra.mrb[0].mxu0 %v1573
        %v1650 = vpop.f32.mrb[0].mxu0
        %v1651 = vadd.f32 %v1610, %v1650
        %v1652 = vpop.f32.mrb[0].mxu0
        %v1653 = vpop.f32.mrb[0].mxu0
        %v1654 = vadd.f32 %v1613, %v1653
        %v1655 = vpop.f32.mrb[0].mxu0
        %1656 = vdwg.mxu0
        %v1658 = vsel %vm329, %v1571, 0
        %1660 = vmatprep.subr.bf16.mxu0 0
        %1661 = vmatpush1.bf16.msra.mxu0 %v1056
        %1662 = vmatprep.subr.bf16.mxu0 0
        %1663 = vmatpush1.bf16.msra.mxu0 0
        %1664 = vmatprep.subr.bf16.mxu0 0
        %1665 = vmatpush1.bf16.msra.mxu0 0
        %1666 = vmatprep.subr.bf16.mxu0 0
        %1667 = vmatpush1.bf16.msra.mxu0 0
        %1668 = vmatprep.subr.bf16.mxu0 0
        %1669 = vmatpush1.bf16.msra.mxu0 0
        %1670 = vmatprep.subr.bf16.mxu0 0
        %1671 = vmatpush1.bf16.msra.mxu0 0
        %1672 = vmatprep.subr.bf16.mxu0 0
        %1673 = vmatpush1.bf16.msra.mxu0 0
        %1674 = vmatprep.subr.bf16.mxu0 0
        %1675 = vmatpush1.bf16.msra.mxu0 0
        %1676 = vmatprep.subr.bf16.mxu0 0
        %1677 = vmatpush1.bf16.msra.mxu0 0
        %1678 = vmatprep.subr.bf16.mxu0 0
        %1679 = vmatpush1.bf16.msra.mxu0 0
        %1680 = vmatprep.subr.bf16.mxu0 0
        %1681 = vmatpush1.bf16.msra.mxu0 0
        %1682 = vmatprep.subr.bf16.mxu0 0
        %1683 = vmatpush1.bf16.msra.mxu0 0
        %1684 = vmatprep.subr.bf16.mxu0 0
        %1685 = vmatpush1.bf16.msra.mxu0 0
        %1686 = vmatprep.subr.bf16.mxu0 0
        %1687 = vmatpush1.bf16.msra.mxu0 0
        %1688 = vmatprep.subr.bf16.mxu0 0
        %1689 = vmatpush1.bf16.msra.mxu0 0
        %1690 = vmatprep.subr.bf16.mxu0 0
        %1691 = vmatpush1.bf16.msra.mxu0 0
        %1692 = vmatprep.mubr.bf16.mxu0 0
        %1693 = vmatmul.mubr.bf16.gmra.mrb[0].mxu0 %v1658
        %v1694 = vpop.f32.mrb[0].mxu0
        %v1695 = vadd.f32 0.0, %v1694
        %v1696 = vpop.f32.mrb[0].mxu0
        %v1697 = vpop.f32.mrb[0].mxu0
        %v1698 = vadd.f32 0.0, %v1697
        %v1699 = vpop.f32.mrb[0].mxu0
        %1700 = vdwg.mxu0
        %v1701 = vadd.f32 %v1651, %v1695
        %v1702 = vadd.f32 %v1654, %v1698
        %v1703 = vsub.f32 %v1701, %v1286
        %v1704 = vsub.f32 %v1702, %v1287
        %v1705 = vmul.f32 %v1286, 2.0
        %v1706 = vmul.f32 %v1287, 2.0
        %v1707 = vadd.f32 %v1705, 0.0001
        %v1708 = vadd.f32 %v1706, 0.0001
        %v1709 = vmul.f32 %v1703, 2.0
        %v1710 = vmul.f32 %v1704, 2.0
        %v1711 = vadd.f32 %v1709, 0.0009
        %v1712 = vadd.f32 %v1710, 0.0009
        %v1713 = vmul.f32 %v1707, %v1711
        %v1714 = vmul.f32 %v1708, %v1712
        %v1715 = vadd.f32 %v1282, %v1284
        %v1716 = vadd.f32 %v1283, %v1285
        %v1717 = vadd.f32 %v1715, 0.0001
        %v1718 = vadd.f32 %v1716, 0.0001
        %v1719 = vadd.f32 %v1425, %v1564
        %v1720 = vadd.f32 %v1426, %v1565
        %v1721 = vadd.f32 %v1719, 0.0009
        %v1722 = vadd.f32 %v1720, 0.0009
        %v1723 = vmul.f32 %v1717, %v1721
        %v1724 = vmul.f32 %v1718, %v1722
        %v1725 = vadd.f32 %v1723, 1e-12
        %v1726 = vadd.f32 %v1724, 1e-12
        %v1727 = vrcp.pop %v1725
        %v1728 = vrcp.pop %v1726
        %v1729 = vmul.f32 %v1725, %v1727
        %v1730 = vmul.f32 %v1726, %v1728
        %v1731 = vsub.f32 2.0, %v1729
        %v1732 = vsub.f32 2.0, %v1730
        %v1733 = vmul.f32 %v1727, %v1731
        %v1734 = vmul.f32 %v1728, %v1732
        %v1735 = vmul.f32 %v1713, %v1733
        %v1736 = vmul.f32 %v1714, %v1734
        %v1737 = vsel %vm329, %v1735, 0.0
        %v1738 = vsel %vm329, %v1736, 0.0
        %v1739 = vadd.f32 %v1737, %v1738
        %v1740 = vrot.slane %v1739, 4
        %v1741 = vadd.f32 %v1739, %v1740
        %v1742 = vrot.slane %v1741, 2
        %v1743 = vadd.f32 %v1741, %v1742
        %v1744 = vrot.slane %v1743, 1
        %v1745 = vadd.f32 %v1743, %v1744
        %vm1746 = vcmask 122880
        %1747 = vst.msk [vmem:[%s297] sm:$0x1] %vm1746, %v1745
        %s1748 = sand.u32 %s141, 1
        %s1749 = scalar_lea.sflag [#allocation4], %s1748
        %s1750 = sand.u32 %s141, 1
        %s1751 = scalar_lea.vmem [#allocation10], %s1750
        // Predicated region
        $region53: #{tpu_custom_call.1} parent=35 // pred_check
          %p1752 = pneg %p151
        $region54: #{tpu_custom_call.1} parent=35 // pred_check_branch
          %1754 = sbr.rel (%p1752) target = $region56
        $region55: #{tpu_custom_call.1} parent=35 // pred_region
          %s1756 = ssub.s32 16, 16
          %1757 = vsyncadd %s1749, %s1756
          %s1758 = sadd.s32 %s30, %s29
          %s1759 = smul.addr %s1758, 16
          %s1760 = scalar_lea.hbm %s4, %s1759
          %s1762 = sshll.u32 %s1751, 4
          %s1763 = int_to_ptr.vmem [resolvable:$true] %s1762
          %1765 = dma.vmem_to_hbm [thread:$0]  %s1763, 16, %s1760, %s1749
        $region56: #{tpu_custom_call.1} parent=35 // pred_fallthru
          _
      $region36: #{tpu_custom_call.1} parent=5 // pred_fallthru
        _
      %p1766 = scmp.le.s32.totalorder 2, %s20
      // Predicated region
      $region57: #{tpu_custom_call.1} parent=5 // pred_check
        %p1767 = pneg %p1766
      $region58: #{tpu_custom_call.1} parent=5 // pred_check_branch
        %1769 = sbr.rel (%p1767) target = $region60
      $region59: #{tpu_custom_call.1} parent=5 // pred_region
        %s1770 = ssub.s32 %s20, 2
        // Predicated region
        $region61: #{tpu_custom_call.1} parent=59 // pred_check
          %p1771 = pneg %p157
        $region62: #{tpu_custom_call.1} parent=59 // pred_check_branch
          %1773 = sbr.rel (%p1771) target = $region64
        $region63: #{tpu_custom_call.1} parent=59 // pred_region
          %s1774 = sand.u32 %s142, 1
          %s1775 = scalar_lea.sflag [#allocation4], %s1774
          %s1776 = sand.u32 %s142, 1
          %s1777 = scalar_lea.vmem [#allocation10], %s1776
          %1778 = dma.done %s1775, 16
        $region64: #{tpu_custom_call.1} parent=59 // pred_fallthru
          _
      $region60: #{tpu_custom_call.1} parent=5 // pred_fallthru
        _
    $region6: #{tpu_custom_call.1} parent=1 // loop_footer
      %s24 = sadd.s32 1, %s20
    $region7: #{tpu_custom_call.1} parent=1 // loop_footer_branch
      %19 = sbr.rel target = $region3
    $region8: #{tpu_custom_call.1} parent=1 // loop_exit
      _
    %1779 = vsyncpa [#allocation3], 1
    %s1780 = scalar_lea.sflag [#allocation3], 1
    %1781 = vsyncpa %s1780, 1
    %1782 = vsyncpa [#allocation6], 1
    %s1783 = scalar_lea.sflag [#allocation6], 1
    %1784 = vsyncpa %s1783, 1
    %1785 = vsyncpa [#allocation9], 1
    %1786 = vsyncpa [#allocation4], 1
    %s1787 = scalar_lea.sflag [#allocation4], 1
    %1788 = vsyncpa %s1787, 1

</llo_original>
